<compile_context>
chip_gen: v7x
topology: tpu7x:2x2x1
jax: 0.10.0
libtpu: 0.0.40
codegen_flags: <defaults>
</compile_context>

<pallas_src>
import jax
import jax.numpy as jnp
import numpy as np
from jax.experimental import pallas as pl
from jax.experimental.pallas import tpu as pltpu

BN_EPS = 1e-5
EDGE_DIM_PAD = 8      # pad edge_dim (3) -> 8: sublane-friendly nn1 contraction dim
OUT_LANES = 128       # lane-dense output slab; column 0 carries y


def _round_up(v, m):
    return ((v + m - 1) // m) * m


def edge_gnn_kernel(
    # node-tiled
    x_ref,          # [tn, 1]   node features (in_channels = 1)
    # edge-tiled (double-buffered by BlockSpec)
    ea_ref,         # [te, DP]  edge attributes (zero-padded edge_dim)
    xsrc_ref,       # [te, 1]   x[src] gathered in the wrapper (0 for padded edges)
    dst_ref,        # [1, te]   int32 dst index per edge (-1 sentinel for padding)
    # parameters (small, constant blocks)
    nn1_w1_ref,     # [DP, H]
    nn1_b1_ref,     # [1, H]
    nn1_w2_ref,     # [H, H+1]  last column = 0
    nn1_b2_ref,     # [1, H+1]  last element = 1  (degree column)
    root_w_ref,     # [1, H]
    conv_b_ref,     # [1, H]
    bn_scale_ref,   # [1, H]    gamma / sqrt(var + eps)
    bn_shift_ref,   # [1, H]    beta - mean * gamma / sqrt(var + eps)
    lin1_w_ref,     # [H, H2]
    lin1_b_ref,     # [1, H2]
    lin2_w_ref,     # [1, H2]   row layout of [H2, 1]
    lin2_b_ref,     # [1, 1]
    # outputs / scratch
    out_ref,        # [tn, OUT_LANES]
    acc_ref,        # [tn, H+1] VMEM accumulator: [:, :H] = sum msgs, [:, H] = degree
):
    f32 = jnp.float32
    n_idx = pl.program_id(0)
    e_idx = pl.program_id(1)
    tn = out_ref.shape[0]
    te = ea_ref.shape[0]
    H = nn1_w1_ref.shape[1]
    Ha = nn1_w2_ref.shape[1]          # H + 1

    @pl.when(e_idx == 0)
    def _init():
        acc_ref[...] = jnp.zeros_like(acc_ref)

    # ---- nn1: per-edge weight vector, width H+1 (last column is exactly 1) ----
    h = jnp.dot(ea_ref[...], nn1_w1_ref[...], preferred_element_type=f32) + nn1_b1_ref[...]
    h = jnp.maximum(h, 0.0)
    w_e = jnp.dot(h, nn1_w2_ref[...], preferred_element_type=f32) + nn1_b2_ref[...]   # [te, Ha]

    # msgs_aug[:, :H] = w_e * x_src (NNConv message), msgs_aug[:, H] = 1 (degree)
    lane = jax.lax.broadcasted_iota(jnp.int32, (te, Ha), 1)
    xs = jnp.where(lane < H, xsrc_ref[...], 1.0)                                       # [te, Ha]
    msgs_aug = w_e * xs

    # ---- dense scatter for this (node tile, edge tile): one MXU matmul ----
    rows = jax.lax.broadcasted_iota(jnp.int32, (tn, te), 0) + n_idx * tn
    dst_onehot = (dst_ref[...] == rows).astype(f32)                                    # [tn, te]
    acc_ref[...] += jnp.dot(dst_onehot, msgs_aug, preferred_element_type=f32)          # [tn, Ha]

    # ---- finalize once per node tile ----
    @pl.when(e_idx == pl.num_programs(1) - 1)
    def _finalize():
        acc = acc_ref[...]
        agg = acc[:, :H]
        deg = acc[:, H:]
        inv_deg = pl.reciprocal(jnp.maximum(deg, 1.0), approx=True)
        out = agg * inv_deg + x_ref[...] * root_w_ref[...] + conv_b_ref[...]           # NNConv root+bias
        out = out * bn_scale_ref[...] + bn_shift_ref[...]                              # folded eval BN
        out = jnp.maximum(out, 0.0)                                                    # ReLU (dropout = id)
        h1 = jnp.dot(out, lin1_w_ref[...], preferred_element_type=f32) + lin1_b_ref[...]
        h1 = jax.nn.sigmoid(h1)
        y = jnp.sum(h1 * lin2_w_ref[...], axis=1, keepdims=True) + lin2_b_ref[...]     # [tn, 1]
        out_ref[...] = jnp.broadcast_to(y, out_ref.shape)   # lane-dense store; col 0 holds y


def edge_aware_gnn_forward(x, src, dst, edge_attr, params, *, tn=None, te=None):
    """Pad / reshape in the wrapper, then a (node-tiles, edge-tiles) Pallas call."""
    x = jnp.asarray(x, jnp.float32)
    edge_attr = jnp.asarray(edge_attr, jnp.float32)
    N = x.shape[0]
    E = edge_attr.shape[0]
    edge_dim = edge_attr.shape[1]
    H = params["nn1_w1"].shape[1]
    H2 = params["lin1_w"].shape[1]
    DP = EDGE_DIM_PAD

    # Tile sizes: tn multiple of 8 (sublane), te multiple of 128 (lane). Kept small
    # enough that the working set fits v7x's 64 MiB VMEM with room to spare.
    if tn is None:
        tn = min(256, _round_up(N, 8))
    if te is None:
        te = min(512, _round_up(E, 128))
    assert tn % 8 == 0 and te % 128 == 0
    N_pad = _round_up(N, tn)
    E_pad = _round_up(E, te)
    n_tiles = N_pad // tn
    e_tiles = E_pad // te

    x_flat = x.reshape(N)
    x_col = jnp.zeros((N_pad, 1), jnp.float32).at[:N, 0].set(x_flat)
    # Gather x[src] on the wrapper side (cheap XLA gather) -> no [E, N] one-hot in kernel.
    x_src = jnp.zeros((E_pad, 1), jnp.float32).at[:E, 0].set(x_flat[src])
    ea_pad = jnp.zeros((E_pad, DP), jnp.float32).at[:E, :edge_dim].set(edge_attr)
    # Padded edges get dst = -1 so they never match any node row (contribute 0 to agg & deg).
    dst_row = jnp.full((1, E_pad), -1, jnp.int32).at[0, :E].set(dst.astype(jnp.int32))

    # Fold eval-mode BatchNorm into a single scale/shift.
    inv_std = 1.0 / jnp.sqrt(params["bn_v"] + BN_EPS)
    bn_scale = (params["bn_g"] * inv_std).reshape(1, H).astype(jnp.float32)
    bn_shift = (params["bn_b"] - params["bn_m"] * params["bn_g"] * inv_std).reshape(1, H).astype(jnp.float32)

    # Pad nn1 weights: w1 -> contraction dim 8; w2/b2 -> width H+1 with a constant-1 column
    # so the scatter matmul also produces the per-node degree.
    w1_pad = jnp.zeros((DP, H), jnp.float32).at[:edge_dim, :].set(params["nn1_w1"])
    w2_aug = jnp.zeros((H, H + 1), jnp.float32).at[:, :H].set(params["nn1_w2"])
    b2_aug = jnp.zeros((1, H + 1), jnp.float32).at[0, :H].set(params["nn1_b2"]).at[0, H].set(1.0)

    param_inputs = (
        w1_pad,
        params["nn1_b1"].reshape(1, H).astype(jnp.float32),
        w2_aug,
        b2_aug,
        params["root_w"].reshape(1, H).astype(jnp.float32),
        params["conv_b"].reshape(1, H).astype(jnp.float32),
        bn_scale,
        bn_shift,
        params["lin1_w"].astype(jnp.float32),
        params["lin1_b"].reshape(1, H2).astype(jnp.float32),
        params["lin2_w"].reshape(1, H2).astype(jnp.float32),
        params["lin2_b"].reshape(1, 1).astype(jnp.float32),
    )

    node_spec = pl.BlockSpec((tn, 1), lambda n, e: (n, 0))
    ea_spec = pl.BlockSpec((te, DP), lambda n, e: (e, 0))
    xsrc_spec = pl.BlockSpec((te, 1), lambda n, e: (e, 0))
    dst_spec = pl.BlockSpec((1, te), lambda n, e: (0, e))
    param_specs = [pl.BlockSpec(p.shape, lambda n, e: (0, 0)) for p in param_inputs]
    out_spec = pl.BlockSpec((tn, OUT_LANES), lambda n, e: (n, 0))

    # Advisory cost estimate (scatter matmul dominates: 2*N*E*(H+1) FLOPs).
    flops = int(
        n_tiles * (2 * E_pad * DP * H + 2 * E_pad * H * (H + 1))   # nn1, recomputed per node tile
        + 2 * N_pad * E_pad * (H + 1)                              # one-hot scatter matmul
        + 2 * N_pad * (H * H2 + H2)                                # lin1 + lin2
    )
    param_bytes = sum(int(p.size) * 4 for p in param_inputs)
    edge_bytes = (int(ea_pad.size) + int(x_src.size) + int(dst_row.size)) * 4
    bytes_accessed = int(x_col.size) * 4 + n_tiles * edge_bytes + param_bytes + N_pad * OUT_LANES * 4
    cost = pl.CostEstimate(flops=flops, transcendentals=int(N_pad * H2),
                           bytes_accessed=int(bytes_accessed))

    # VMEM budget: [tn,te] one-hot + [tn,H+1] accumulator + double-buffered edge tiles
    # + output slab + params, with generous margin; capped at 32 MiB (safe on v5e/v6e/v7x).
    work_bytes = 4 * (tn * te + tn * (H + 1) + 2 * te * (DP + 2) + 3 * te * (H + 1)
                      + 2 * tn * OUT_LANES) + param_bytes
    vmem_limit = int(min(max(4 * work_bytes, 16 * 1024 * 1024), 32 * 1024 * 1024))

    out = pl.pallas_call(
        edge_gnn_kernel,
        out_shape=jax.ShapeDtypeStruct((N_pad, OUT_LANES), jnp.float32),
        grid=(n_tiles, e_tiles),
        in_specs=[node_spec, ea_spec, xsrc_spec, dst_spec] + param_specs,
        out_specs=out_spec,
        scratch_shapes=[pltpu.VMEM((tn, H + 1), jnp.float32)],
        compiler_params=pltpu.CompilerParams(
            dimension_semantics=("parallel", "arbitrary"),
            vmem_limit_bytes=vmem_limit),
        cost_estimate=cost,
    )(x_col, ea_pad, x_src, dst_row, *param_inputs)

    return out[:N, :1]


def reference_forward(x, src, dst, edge_attr, params):
    """Pure-JAX reference with identical (eval-mode) semantics."""
    N = x.shape[0]
    H = params["nn1_w1"].shape[1]
    h = jnp.maximum(edge_attr @ params["nn1_w1"] + params["nn1_b1"], 0.0)
    w_e = h @ params["nn1_w2"] + params["nn1_b2"]                    # [E, H]
    msgs = w_e * x[src]                                              # [E, H]
    agg = jnp.zeros((N, H), jnp.float32).at[dst].add(msgs)
    cnt = jnp.zeros((N, 1), jnp.float32).at[dst].add(1.0)
    agg = agg / jnp.maximum(cnt, 1.0)
    out = agg + x @ params["root_w"] + params["conv_b"]
    out = (out - params["bn_m"]) / jnp.sqrt(params["bn_v"] + BN_EPS) * params["bn_g"] + params["bn_b"]
    out = jnp.maximum(out, 0.0)
    h1 = jax.nn.sigmoid(out @ params["lin1_w"] + params["lin1_b"])
    return h1 @ params["lin2_w"] + params["lin2_b"]


if __name__ == "__main__":
    # Small synthetic graph sized to exercise the tiling:
    # in_channels=1, edge_dim=3, hidden_channels=16; grid = (2 node tiles, 3 edge tiles).
    N, E = 64, 384
    IN_C, EDGE_D, H = 1, 3, 16
    H2 = H // 2

    key = jax.random.PRNGKey(0)
    ks = jax.random.split(key, 20)

    def init(k, shape, scale=0.1):
        return jax.random.normal(k, shape, jnp.float32) * scale

    params = {
        "nn1_w1": init(ks[0], (EDGE_D, H)),
        "nn1_b1": init(ks[1], (H,)),
        "nn1_w2": init(ks[2], (H, H)),
        "nn1_b2": init(ks[3], (H,)),
        "root_w": init(ks[4], (IN_C, H)),
        "conv_b": init(ks[5], (H,)),
        "bn_g":   1.0 + init(ks[6], (H,)),
        "bn_b":   init(ks[7], (H,)),
        "bn_m":   init(ks[8], (H,)),
        "bn_v":   1.0 + jnp.abs(init(ks[9], (H,))),
        "lin1_w": init(ks[10], (H, H2)),
        "lin1_b": init(ks[11], (H2,)),
        "lin2_w": init(ks[12], (H2, 1)),
        "lin2_b": init(ks[13], (1,)),
    }

    x = init(ks[14], (N, IN_C), scale=1.0)                       # node features [N, 1]
    edge_attr = init(ks[15], (E, EDGE_D), scale=1.0)             # edge attrs    [E, 3]
    src = jax.random.randint(ks[16], (E,), 0, N, dtype=jnp.int32)
    dst = jax.random.randint(ks[17], (E,), 0, N, dtype=jnp.int32)

    y_kernel = jax.block_until_ready(
        edge_aware_gnn_forward(x, src, dst, edge_attr, params, tn=32, te=128))
    y_ref = jax.block_until_ready(reference_forward(x, src, dst, edge_attr, params))

    assert y_kernel.shape == (N, 1)
    np.testing.assert_allclose(np.asarray(y_kernel), np.asarray(y_ref), rtol=2e-3, atol=2e-3)
    print("KERNEL_OK")
</pallas_src>

<mosaic_0001>
module attributes {stable_mosaic.version = 11 : i64} {
  func.func @edge_gnn_kernel(%arg0: i32, %arg1: i32, %arg2: memref<32x1xf32, #tpu.memory_space<vmem>>, %arg3: memref<128x8xf32, #tpu.memory_space<vmem>>, %arg4: memref<128x1xf32, #tpu.memory_space<vmem>>, %arg5: memref<1x128xi32, #tpu.memory_space<vmem>>, %arg6: memref<8x16xf32, #tpu.memory_space<vmem>>, %arg7: memref<1x16xf32, #tpu.memory_space<vmem>>, %arg8: memref<16x17xf32, #tpu.memory_space<vmem>>, %arg9: memref<1x17xf32, #tpu.memory_space<vmem>>, %arg10: memref<1x16xf32, #tpu.memory_space<vmem>>, %arg11: memref<1x16xf32, #tpu.memory_space<vmem>>, %arg12: memref<1x16xf32, #tpu.memory_space<vmem>>, %arg13: memref<1x16xf32, #tpu.memory_space<vmem>>, %arg14: memref<16x8xf32, #tpu.memory_space<vmem>>, %arg15: memref<1x8xf32, #tpu.memory_space<vmem>>, %arg16: memref<1x8xf32, #tpu.memory_space<vmem>>, %arg17: memref<1x1xf32, #tpu.memory_space<vmem>>, %arg18: memref<32x128xf32, #tpu.memory_space<vmem>>, %arg19: memref<32x17xf32, #tpu.memory_space<vmem>>) attributes {dimension_semantics = [#tpu.dimension_semantics<parallel>, #tpu.dimension_semantics<arbitrary>], iteration_bounds = array<i64: 2, 3>, scalar_prefetch = 0 : i64, scratch_operands = 1 : i64, tpu.core_type = #tpu.core_type<tc>, window_params = [{transform_indices = @transform_0, window_bounds = array<i64: 32, 1>}, {transform_indices = @transform_1, window_bounds = array<i64: 128, 8>}, {transform_indices = @transform_2, window_bounds = array<i64: 128, 1>}, {transform_indices = @transform_3, window_bounds = array<i64: 1, 128>}, {pipeline_mode = #tpu.pipeline_mode<synchronous>, transform_indices = @transform_4, window_bounds = array<i64: 8, 16>}, {pipeline_mode = #tpu.pipeline_mode<synchronous>, transform_indices = @transform_5, window_bounds = array<i64: 1, 16>}, {pipeline_mode = #tpu.pipeline_mode<synchronous>, transform_indices = @transform_6, window_bounds = array<i64: 16, 17>}, {pipeline_mode = #tpu.pipeline_mode<synchronous>, transform_indices = @transform_7, window_bounds = array<i64: 1, 17>}, {pipeline_mode = #tpu.pipeline_mode<synchronous>, transform_indices = @transform_8, window_bounds = array<i64: 1, 16>}, {pipeline_mode = #tpu.pipeline_mode<synchronous>, transform_indices = @transform_9, window_bounds = array<i64: 1, 16>}, {pipeline_mode = #tpu.pipeline_mode<synchronous>, transform_indices = @transform_10, window_bounds = array<i64: 1, 16>}, {pipeline_mode = #tpu.pipeline_mode<synchronous>, transform_indices = @transform_11, window_bounds = array<i64: 1, 16>}, {pipeline_mode = #tpu.pipeline_mode<synchronous>, transform_indices = @transform_12, window_bounds = array<i64: 16, 8>}, {pipeline_mode = #tpu.pipeline_mode<synchronous>, transform_indices = @transform_13, window_bounds = array<i64: 1, 8>}, {pipeline_mode = #tpu.pipeline_mode<synchronous>, transform_indices = @transform_14, window_bounds = array<i64: 1, 8>}, {pipeline_mode = #tpu.pipeline_mode<synchronous>, transform_indices = @transform_15, window_bounds = array<i64: 1, 1>}, {transform_indices = @transform_16, window_bounds = array<i64: 32, 128>}]} {
    %c0_i32 = arith.constant 0 : i32
    %0 = arith.cmpi eq, %arg1, %c0_i32 : i32
    %1 = arith.extui %0 : i1 to i32
    %c0_i32_0 = arith.constant 0 : i32
    %2 = arith.cmpi ne, %1, %c0_i32_0 : i32
    scf.if %2 {
      %cst_23 = arith.constant 0.000000e+00 : f32
      %41 = vector.broadcast %cst_23 : f32 to vector<32x17xf32>
      %c0_24 = arith.constant 0 : index
      %c0_25 = arith.constant 0 : index
      %42 = vector.load %arg19[%c0_24, %c0_25] : memref<32x17xf32, #tpu.memory_space<vmem>>, vector<32x17xf32>
      tpu.vector_store %arg19[%c0_24, %c0_25], %41 {strides = array<i32>} : memref<32x17xf32, #tpu.memory_space<vmem>>, vector<32x17xf32>,
    } else {
    }
    %c0 = arith.constant 0 : index
    %c0_1 = arith.constant 0 : index
    %3 = vector.load %arg3[%c0, %c0_1] : memref<128x8xf32, #tpu.memory_space<vmem>>, vector<128x8xf32>
    %c0_2 = arith.constant 0 : index
    %c0_3 = arith.constant 0 : index
    %4 = vector.load %arg6[%c0_2, %c0_3] : memref<8x16xf32, #tpu.memory_space<vmem>>, vector<8x16xf32>
    %cst = arith.constant dense<0.000000e+00> : vector<128x16xf32>
    %5 = tpu.matmul %3, %4, %cst {dimension_numbers = #tpu.dot_dimension_numbers<[1], [0], [0], [1], [0, 0, 1, 1], [], []>} : vector<128x8xf32>, vector<8x16xf32>, vector<128x16xf32> -> vector<128x16xf32>
    %c0_4 = arith.constant 0 : index
    %c0_5 = arith.constant 0 : index
    %6 = vector.load %arg7[%c0_4, %c0_5] : memref<1x16xf32, #tpu.memory_space<vmem>>, vector<1x16xf32>
    %7 = vector.broadcast %6 : vector<1x16xf32> to vector<128x16xf32>
    %8 = arith.addf %5, %7 : vector<128x16xf32>
    %cst_6 = arith.constant 0.000000e+00 : f32
    %9 = vector.broadcast %cst_6 : f32 to vector<128x16xf32>
    %10 = arith.maximumf %8, %9 : vector<128x16xf32>
    %c0_7 = arith.constant 0 : index
    %c0_8 = arith.constant 0 : index
    %11 = vector.load %arg8[%c0_7, %c0_8] : memref<16x17xf32, #tpu.memory_space<vmem>>, vector<16x17xf32>
    %cst_9 = arith.constant dense<0.000000e+00> : vector<128x17xf32>
    %12 = tpu.matmul %10, %11, %cst_9 {dimension_numbers = #tpu.dot_dimension_numbers<[1], [0], [0], [1], [0, 0, 1, 1], [], []>} : vector<128x16xf32>, vector<16x17xf32>, vector<128x17xf32> -> vector<128x17xf32>
    %c0_10 = arith.constant 0 : index
    %c0_11 = arith.constant 0 : index
    %13 = vector.load %arg9[%c0_10, %c0_11] : memref<1x17xf32, #tpu.memory_space<vmem>>, vector<1x17xf32>
    %14 = vector.broadcast %13 : vector<1x17xf32> to vector<128x17xf32>
    %15 = arith.addf %12, %14 : vector<128x17xf32>
    %16 = tpu.iota {dimensions = array<i32: 1>} : vector<128x17xi32>
    %c16_i32 = arith.constant 16 : i32
    %17 = vector.broadcast %c16_i32 : i32 to vector<128x17xi32>
    %18 = arith.cmpi slt, %16, %17 : vector<128x17xi32>
    %c0_12 = arith.constant 0 : index
    %c0_13 = arith.constant 0 : index
    %19 = vector.load %arg4[%c0_12, %c0_13] : memref<128x1xf32, #tpu.memory_space<vmem>>, vector<128x1xf32>
    %cst_14 = arith.constant 1.000000e+00 : f32
    %20 = vector.shape_cast %19 : vector<128x1xf32> to vector<128x1xf32>
    %21 = vector.broadcast %20 : vector<128x1xf32> to vector<128x17xf32>
    %22 = vector.broadcast %cst_14 : f32 to vector<128x17xf32>
    %23 = arith.select %18, %21, %22 : vector<128x17xi1>, vector<128x17xf32>
    %24 = arith.mulf %15, %23 : vector<128x17xf32>
    %25 = tpu.iota {dimensions = array<i32: 0>} : vector<32x128xi32>
    %c32_i32 = arith.constant 32 : i32
    %26 = arith.muli %arg0, %c32_i32 : i32
    %27 = vector.broadcast %26 : i32 to vector<32x128xi32>
    %28 = arith.addi %25, %27 : vector<32x128xi32>
    %c0_15 = arith.constant 0 : index
    %c0_16 = arith.constant 0 : index
    %29 = vector.load %arg5[%c0_15, %c0_16] : memref<1x128xi32, #tpu.memory_space<vmem>>, vector<1x128xi32>
    %30 = vector.broadcast %29 : vector<1x128xi32> to vector<32x128xi32>
    %31 = arith.cmpi eq, %30, %28 : vector<32x128xi32>
    %32 = arith.extui %31 : vector<32x128xi1> to vector<32x128xi32>
    %33 = arith.sitofp %32 : vector<32x128xi32> to vector<32x128xf32>
    %c0_17 = arith.constant 0 : index
    %c0_18 = arith.constant 0 : index
    %34 = vector.load %arg19[%c0_17, %c0_18] : memref<32x17xf32, #tpu.memory_space<vmem>>, vector<32x17xf32>
    %cst_19 = arith.constant dense<0.000000e+00> : vector<32x17xf32>
    %35 = tpu.matmul %33, %24, %cst_19 {dimension_numbers = #tpu.dot_dimension_numbers<[1], [0], [0], [1], [0, 0, 1, 1], [], []>} : vector<32x128xf32>, vector<128x17xf32>, vector<32x17xf32> -> vector<32x17xf32>
    %36 = arith.addf %34, %35 : vector<32x17xf32>
    %c0_20 = arith.constant 0 : index
    %c0_21 = arith.constant 0 : index
    %37 = vector.load %arg19[%c0_20, %c0_21] : memref<32x17xf32, #tpu.memory_space<vmem>>, vector<32x17xf32>
    tpu.vector_store %arg19[%c0_20, %c0_21], %36 {strides = array<i32>} : memref<32x17xf32, #tpu.memory_space<vmem>>, vector<32x17xf32>,
    %c2_i32 = arith.constant 2 : i32
    %38 = arith.cmpi eq, %arg1, %c2_i32 : i32
    %39 = arith.extui %38 : i1 to i32
    %c0_i32_22 = arith.constant 0 : i32
    %40 = arith.cmpi ne, %39, %c0_i32_22 : i32
    scf.if %40 {
      %c0_23 = arith.constant 0 : index
      %c0_24 = arith.constant 0 : index
      %41 = vector.load %arg19[%c0_23, %c0_24] : memref<32x17xf32, #tpu.memory_space<vmem>>, vector<32x17xf32>
      %42 = vector.extract_strided_slice %41 {offsets = [0, 0], sizes = [32, 16], strides = [1, 1]} : vector<32x17xf32> to vector<32x16xf32>
      %43 = vector.extract_strided_slice %41 {offsets = [0, 16], sizes = [32, 1], strides = [1, 1]} : vector<32x17xf32> to vector<32x1xf32>
      %cst_25 = arith.constant 1.000000e+00 : f32
      %44 = vector.broadcast %cst_25 : f32 to vector<32x1xf32>
      %45 = arith.maximumf %43, %44 : vector<32x1xf32>
      %46 = tpu.reciprocal %45 {approx = true} : vector<32x1xf32> -> vector<32x1xf32>
      %47 = vector.broadcast %46 : vector<32x1xf32> to vector<32x16xf32>
      %48 = arith.mulf %42, %47 : vector<32x16xf32>
      %c0_26 = arith.constant 0 : index
      %c0_27 = arith.constant 0 : index
      %49 = vector.load %arg2[%c0_26, %c0_27] : memref<32x1xf32, #tpu.memory_space<vmem>>, vector<32x1xf32>
      %c0_28 = arith.constant 0 : index
      %c0_29 = arith.constant 0 : index
      %50 = vector.load %arg10[%c0_28, %c0_29] : memref<1x16xf32, #tpu.memory_space<vmem>>, vector<1x16xf32>
      %51 = vector.broadcast %49 : vector<32x1xf32> to vector<32x16xf32>
      %52 = vector.broadcast %50 : vector<1x16xf32> to vector<32x16xf32>
      %53 = arith.mulf %51, %52 : vector<32x16xf32>
      %54 = arith.addf %48, %53 : vector<32x16xf32>
      %c0_30 = arith.constant 0 : index
      %c0_31 = arith.constant 0 : index
      %55 = vector.load %arg11[%c0_30, %c0_31] : memref<1x16xf32, #tpu.memory_space<vmem>>, vector<1x16xf32>
      %56 = vector.broadcast %55 : vector<1x16xf32> to vector<32x16xf32>
      %57 = arith.addf %54, %56 : vector<32x16xf32>
      %c0_32 = arith.constant 0 : index
      %c0_33 = arith.constant 0 : index
      %58 = vector.load %arg12[%c0_32, %c0_33] : memref<1x16xf32, #tpu.memory_space<vmem>>, vector<1x16xf32>
      %59 = vector.broadcast %58 : vector<1x16xf32> to vector<32x16xf32>
      %60 = arith.mulf %57, %59 : vector<32x16xf32>
      %c0_34 = arith.constant 0 : index
      %c0_35 = arith.constant 0 : index
      %61 = vector.load %arg13[%c0_34, %c0_35] : memref<1x16xf32, #tpu.memory_space<vmem>>, vector<1x16xf32>
      %62 = vector.broadcast %61 : vector<1x16xf32> to vector<32x16xf32>
      %63 = arith.addf %60, %62 : vector<32x16xf32>
      %cst_36 = arith.constant 0.000000e+00 : f32
      %64 = vector.broadcast %cst_36 : f32 to vector<32x16xf32>
      %65 = arith.maximumf %63, %64 : vector<32x16xf32>
      %c0_37 = arith.constant 0 : index
      %c0_38 = arith.constant 0 : index
      %66 = vector.load %arg14[%c0_37, %c0_38] : memref<16x8xf32, #tpu.memory_space<vmem>>, vector<16x8xf32>
      %cst_39 = arith.constant dense<0.000000e+00> : vector<32x8xf32>
      %67 = tpu.matmul %65, %66, %cst_39 {dimension_numbers = #tpu.dot_dimension_numbers<[1], [0], [0], [1], [0, 0, 1, 1], [], []>} : vector<32x16xf32>, vector<16x8xf32>, vector<32x8xf32> -> vector<32x8xf32>
      %c0_40 = arith.constant 0 : index
      %c0_41 = arith.constant 0 : index
      %68 = vector.load %arg15[%c0_40, %c0_41] : memref<1x8xf32, #tpu.memory_space<vmem>>, vector<1x8xf32>
      %69 = vector.broadcast %68 : vector<1x8xf32> to vector<32x8xf32>
      %70 = arith.addf %67, %69 : vector<32x8xf32>
      %71 = arith.negf %70 : vector<32x8xf32>
      %72 = math.exp %71 : vector<32x8xf32>
      %cst_42 = arith.constant 1.000000e+00 : f32
      %73 = vector.broadcast %cst_42 : f32 to vector<32x8xf32>
      %74 = arith.addf %73, %72 : vector<32x8xf32>
      %75 = arith.divf %73, %74 : vector<32x8xf32>
      %c0_43 = arith.constant 0 : index
      %c0_44 = arith.constant 0 : index
      %76 = vector.load %arg16[%c0_43, %c0_44] : memref<1x8xf32, #tpu.memory_space<vmem>>, vector<1x8xf32>
      %77 = vector.broadcast %76 : vector<1x8xf32> to vector<32x8xf32>
      %78 = arith.mulf %75, %77 : vector<32x8xf32>
      %cst_45 = arith.constant dense<0.000000e+00> : vector<32xf32>
      %79 = vector.multi_reduction <add>, %78, %cst_45 [1] : vector<32x8xf32> to vector<32xf32>
      %80 = vector.shape_cast %79 : vector<32xf32> to vector<32x1xf32>
      %c0_46 = arith.constant 0 : index
      %c0_47 = arith.constant 0 : index
      %81 = vector.load %arg17[%c0_46, %c0_47] : memref<1x1xf32, #tpu.memory_space<vmem>>, vector<1x1xf32>
      %82 = vector.broadcast %81 : vector<1x1xf32> to vector<32x1xf32>
      %83 = arith.addf %80, %82 : vector<32x1xf32>
      %84 = vector.shape_cast %83 : vector<32x1xf32> to vector<32x1xf32>
      %85 = vector.broadcast %84 : vector<32x1xf32> to vector<32x128xf32>
      %c0_48 = arith.constant 0 : index
      %c0_49 = arith.constant 0 : index
      %86 = vector.load %arg18[%c0_48, %c0_49] : memref<32x128xf32, #tpu.memory_space<vmem>>, vector<32x128xf32>
      tpu.vector_store %arg18[%c0_48, %c0_49], %85 {strides = array<i32>} : memref<32x128xf32, #tpu.memory_space<vmem>>, vector<32x128xf32>,
    } else {
    }
    return
  }
  func.func @transform_0(%arg0: i32, %arg1: i32) -> (i32, i32) {
    %c0_i32 = arith.constant 0 : i32
    %c0_i32_0 = arith.constant 0 : i32
    return %arg0, %c0_i32 : i32, i32
  }
  func.func @transform_1(%arg0: i32, %arg1: i32) -> (i32, i32) {
    %c0_i32 = arith.constant 0 : i32
    %c0_i32_0 = arith.constant 0 : i32
    return %arg1, %c0_i32 : i32, i32
  }
  func.func @transform_2(%arg0: i32, %arg1: i32) -> (i32, i32) {
    %c0_i32 = arith.constant 0 : i32
    %c0_i32_0 = arith.constant 0 : i32
    return %arg1, %c0_i32 : i32, i32
  }
  func.func @transform_3(%arg0: i32, %arg1: i32) -> (i32, i32) {
    %c0_i32 = arith.constant 0 : i32
    %c0_i32_0 = arith.constant 0 : i32
    return %c0_i32, %arg1 : i32, i32
  }
  func.func @transform_4(%arg0: i32, %arg1: i32) -> (i32, i32) {
    %c0_i32 = arith.constant 0 : i32
    %c0_i32_0 = arith.constant 0 : i32
    %c0_i32_1 = arith.constant 0 : i32
    return %c0_i32, %c0_i32_0 : i32, i32
  }
  func.func @transform_5(%arg0: i32, %arg1: i32) -> (i32, i32) {
    %c0_i32 = arith.constant 0 : i32
    %c0_i32_0 = arith.constant 0 : i32
    %c0_i32_1 = arith.constant 0 : i32
    return %c0_i32, %c0_i32_0 : i32, i32
  }
  func.func @transform_6(%arg0: i32, %arg1: i32) -> (i32, i32) {
    %c0_i32 = arith.constant 0 : i32
    %c0_i32_0 = arith.constant 0 : i32
    %c0_i32_1 = arith.constant 0 : i32
    return %c0_i32, %c0_i32_0 : i32, i32
  }
  func.func @transform_7(%arg0: i32, %arg1: i32) -> (i32, i32) {
    %c0_i32 = arith.constant 0 : i32
    %c0_i32_0 = arith.constant 0 : i32
    %c0_i32_1 = arith.constant 0 : i32
    return %c0_i32, %c0_i32_0 : i32, i32
  }
  func.func @transform_8(%arg0: i32, %arg1: i32) -> (i32, i32) {
    %c0_i32 = arith.constant 0 : i32
    %c0_i32_0 = arith.constant 0 : i32
    %c0_i32_1 = arith.constant 0 : i32
    return %c0_i32, %c0_i32_0 : i32, i32
  }
  func.func @transform_9(%arg0: i32, %arg1: i32) -> (i32, i32) {
    %c0_i32 = arith.constant 0 : i32
    %c0_i32_0 = arith.constant 0 : i32
    %c0_i32_1 = arith.constant 0 : i32
    return %c0_i32, %c0_i32_0 : i32, i32
  }
  func.func @transform_10(%arg0: i32, %arg1: i32) -> (i32, i32) {
    %c0_i32 = arith.constant 0 : i32
    %c0_i32_0 = arith.constant 0 : i32
    %c0_i32_1 = arith.constant 0 : i32
    return %c0_i32, %c0_i32_0 : i32, i32
  }
  func.func @transform_11(%arg0: i32, %arg1: i32) -> (i32, i32) {
    %c0_i32 = arith.constant 0 : i32
    %c0_i32_0 = arith.constant 0 : i32
    %c0_i32_1 = arith.constant 0 : i32
    return %c0_i32, %c0_i32_0 : i32, i32
  }
  func.func @transform_12(%arg0: i32, %arg1: i32) -> (i32, i32) {
    %c0_i32 = arith.constant 0 : i32
    %c0_i32_0 = arith.constant 0 : i32
    %c0_i32_1 = arith.constant 0 : i32
    return %c0_i32, %c0_i32_0 : i32, i32
  }
  func.func @transform_13(%arg0: i32, %arg1: i32) -> (i32, i32) {
    %c0_i32 = arith.constant 0 : i32
    %c0_i32_0 = arith.constant 0 : i32
    %c0_i32_1 = arith.constant 0 : i32
    return %c0_i32, %c0_i32_0 : i32, i32
  }
  func.func @transform_14(%arg0: i32, %arg1: i32) -> (i32, i32) {
    %c0_i32 = arith.constant 0 : i32
    %c0_i32_0 = arith.constant 0 : i32
    %c0_i32_1 = arith.constant 0 : i32
    return %c0_i32, %c0_i32_0 : i32, i32
  }
  func.func @transform_15(%arg0: i32, %arg1: i32) -> (i32, i32) {
    %c0_i32 = arith.constant 0 : i32
    %c0_i32_0 = arith.constant 0 : i32
    %c0_i32_1 = arith.constant 0 : i32
    return %c0_i32, %c0_i32_0 : i32, i32
  }
  func.func @transform_16(%arg0: i32, %arg1: i32) -> (i32, i32) {
    %c0_i32 = arith.constant 0 : i32
    %c0_i32_0 = arith.constant 0 : i32
    return %arg0, %c0_i32 : i32, i32
  }
}

</mosaic_0001>

<llo_original>
// kernel: tpu_custom_call.1
$region0: #{tpu_custom_call.1}
  #allocation0 [shape = 'u32[]', space=smem, size = 0x4, offset = 0x4, fixed_abs, tag = 'smem constant byte address 0x4 - core index']
  #allocation1 [shape = 'u32[144,128]{1,0:T(1,128)}', space=vmem, size = 0x12000, scoped, tag = 'internal scratch']
  #allocation2 [shape = 'f32[32,17]{1,0:T(8,128)}', space=vmem, size = 0x4000, scoped, tag = 'scratch operand']
  #allocation3 [shape = 'f32[1,1]{1,0:T(1,128)S(1)}', space=vmem, size = 0x200, scoped, tag = 'scoped memory for tpu_custom_call.1']
  %s0 = inlined_call_operand.vmem [shape: f32[64,1], index: 0, kind: input, shape index: {}]
  %s1 = inlined_call_operand.vmem [shape: f32[384,8], index: 1, kind: input, shape index: {}]
  %s2 = inlined_call_operand.vmem [shape: f32[384,1], index: 2, kind: input, shape index: {}]
  %s3 = inlined_call_operand.vmem [shape: s32[1,384], index: 3, kind: input, shape index: {}]
  %s4 = inlined_call_operand.vmem [shape: f32[8,16], index: 4, kind: input, shape index: {}]
  %s5 = inlined_call_operand.vmem [shape: f32[1,16], index: 5, kind: input, shape index: {}]
  %s6 = inlined_call_operand.vmem [shape: f32[16,17], index: 6, kind: input, shape index: {}]
  %s7 = inlined_call_operand.vmem [shape: f32[1,17], index: 7, kind: input, shape index: {}]
  %s8 = inlined_call_operand.vmem [shape: f32[1,16], index: 8, kind: input, shape index: {}]
  %s9 = inlined_call_operand.vmem [shape: f32[1,16], index: 9, kind: input, shape index: {}]
  %s10 = inlined_call_operand.vmem [shape: f32[1,16], index: 10, kind: input, shape index: {}]
  %s11 = inlined_call_operand.vmem [shape: f32[1,16], index: 11, kind: input, shape index: {}]
  %s12 = inlined_call_operand.vmem [shape: f32[16,8], index: 12, kind: input, shape index: {}]
  %s13 = inlined_call_operand.vmem [shape: f32[1,8], index: 13, kind: input, shape index: {}]
  %s14 = inlined_call_operand.vmem [shape: f32[1,8], index: 14, kind: input, shape index: {}]
  %s15 = inlined_call_operand.<no memory space> [shape: f32[1,1], index: 15, kind: input, shape index: {}]
  %s16 = inlined_call_operand.hbm [shape: f32[64,128], index: 16, kind: output, shape index: {}]
  %s17 = sld [smem:[#allocation0]]
  $region105: #{tpu_custom_call.1} parent=0
    _
  %s19 = ssub.s32 1, %s17
  %s20 = scalar_select 0, %s19, %s17
  %v21 = vstv %s15
  %22 = vst [vmem:[#allocation3] sm:$0x1] %v21
  $region1: #{tpu_custom_call.1} parent=0
    #allocation4 [shape = 'u8[32768]{0}', space=vmem, size = 0x8000, scoped, tag = 'output window, operand 0']
    #allocation5 [shape = 's32[2]{0}', space=sflag, size = 0x8, scoped, tag = 'scoped memory for tpu_custom_call.1']
    %23 = vsyncpa [#allocation5], 0
    %s24 = scalar_lea.sflag [#allocation5], 1
    %25 = vsyncpa %s24, 0
    loop: start=0, step=1, limit=8
    $region2: #{tpu_custom_call.1} parent=1 // loop_pre_header
      _
    $region3: #{tpu_custom_call.1} parent=1 // loop_header
      %s27 = sphi 0, %s31
      %p28 = scmp.ge.s32.totalorder %s27, 8
      %s34 = sphi 0, %s46
      %s35 = sphi 0, %s42
      %s36 = sphi 0, %s34
      %s37 = sphi 0, %s35
      %s38 = sphi 0, %s36
      %s39 = sphi 0, %s37
      %s49 = sphi 0, %s51
      %s52 = sphi 0, %s49
      %s53 = sphi 0, %s52
      %s69 = sphi 0, %s53
      %s75 = sphi 0, %s77
      %s78 = sphi 0, %s75
      %s79 = sphi 0, %s78
      %s95 = sphi 0, %s79
      %s101 = sphi 0, %s103
      %s104 = sphi 0, %s101
      %s105 = sphi 0, %s104
      %s121 = sphi 0, %s105
      %s127 = sphi 0, %s129
      %s130 = sphi 0, %s127
      %s131 = sphi 0, %s130
      %s147 = sphi 0, %s131
      %s151 = sphi 0, %s151
      %s153 = sphi 0, %s151
      %s154 = sphi 0, %s153
      %s168 = sphi 0, %s154
      %s172 = sphi 0, %s172
      %s174 = sphi 0, %s172
      %s175 = sphi 0, %s174
      %s189 = sphi 0, %s175
      %s193 = sphi 0, %s193
      %s195 = sphi 0, %s193
      %s196 = sphi 0, %s195
      %s210 = sphi 0, %s196
      %s214 = sphi 0, %s214
      %s216 = sphi 0, %s214
      %s217 = sphi 0, %s216
      %s231 = sphi 0, %s217
      %s235 = sphi 0, %s235
      %s237 = sphi 0, %s235
      %s238 = sphi 0, %s237
      %s252 = sphi 0, %s238
      %s256 = sphi 0, %s256
      %s258 = sphi 0, %s256
      %s259 = sphi 0, %s258
      %s273 = sphi 0, %s259
      %s277 = sphi 0, %s277
      %s279 = sphi 0, %s277
      %s280 = sphi 0, %s279
      %s294 = sphi 0, %s280
      %s298 = sphi 0, %s298
      %s300 = sphi 0, %s298
      %s301 = sphi 0, %s300
      %s315 = sphi 0, %s301
      %s319 = sphi 0, %s319
      %s321 = sphi 0, %s319
      %s322 = sphi 0, %s321
      %s336 = sphi 0, %s322
      %s340 = sphi 0, %s340
      %s342 = sphi 0, %s340
      %s343 = sphi 0, %s342
      %s357 = sphi 0, %s343
      %s361 = sphi 0, %s361
      %s363 = sphi 0, %s361
      %s364 = sphi 0, %s363
      %s378 = sphi 0, %s364
      %s382 = sphi 0, %s382
      %s384 = sphi 0, %s382
      %s385 = sphi 0, %s384
      %s399 = sphi 0, %s385
      %s405 = sphi 0, %s407
      %s408 = sphi 0, %s405
      %s409 = sphi 0, %s408
      %s425 = sphi 0, %s409
    $region4: #{tpu_custom_call.1} parent=1 // loop_header_branch
      %30 = sbr.rel (%p28) target = $region8
    $region5: #{tpu_custom_call.1} parent=1 // loop_body
      %s32 = ssub.s32 %s27, 1
      %s33 = ssub.s32 %s27, 2
      %s40 = sadd.s32 1, %s35
      %p41 = scmp.ge.s32.totalorder %s40, 3
      %s42 = scalar_select %p41, 0, %s40
      %s43 = sadd.s32 1, %s34
      %s44 = scalar_select %p41, %s43, %s34
      %p45 = scmp.ge.s32.totalorder %s44, 2
      %s46 = scalar_select %p45, 0, %s44
      %s47 = ssub.s32 %s34, %s46
      %p48 = scmp.eq.s32.totalorder %s47, 0
      %s50 = sadd.s32 %s49, 1
      %s51 = scalar_select %p48, %s49, %s50
      %p54 = pneg %p48
      %p55 = scmp.eq.s32.totalorder %s27, 5
      %p56 = por %p54, %p55
      %p57 = scmp.ne.s32.totalorder %s49, %s52
      %p58 = scmp.eq.s32.totalorder %s27, 0
      %p59 = por %p57, %p58
      %p60 = scmp.ne.s32.totalorder %s49, %s52
      %p61 = scmp.eq.s32.totalorder %s32, 5
      %p62 = por %p60, %p61
      %p63 = scmp.ne.s32.totalorder %s52, %s53
      %p64 = scmp.eq.s32.totalorder %s32, 0
      %p65 = por %p63, %p64
      %p66 = scmp.ne.s32.totalorder %s52, %s53
      %p67 = scmp.eq.s32.totalorder %s33, 5
      %p68 = por %p66, %p67
      %p70 = scmp.ne.s32.totalorder %s53, %s69
      %p71 = scmp.eq.s32.totalorder %s33, 0
      %p72 = por %p70, %p71
      %s73 = ssub.s32 %s35, %s42
      %p74 = scmp.eq.s32.totalorder %s73, 0
      %s76 = sadd.s32 %s75, 1
      %s77 = scalar_select %p74, %s75, %s76
      %p80 = pneg %p74
      %p81 = scmp.eq.s32.totalorder %s27, 5
      %p82 = por %p80, %p81
      %p83 = scmp.ne.s32.totalorder %s75, %s78
      %p84 = scmp.eq.s32.totalorder %s27, 0
      %p85 = por %p83, %p84
      %p86 = scmp.ne.s32.totalorder %s75, %s78
      %p87 = scmp.eq.s32.totalorder %s32, 5
      %p88 = por %p86, %p87
      %p89 = scmp.ne.s32.totalorder %s78, %s79
      %p90 = scmp.eq.s32.totalorder %s32, 0
      %p91 = por %p89, %p90
      %p92 = scmp.ne.s32.totalorder %s78, %s79
      %p93 = scmp.eq.s32.totalorder %s33, 5
      %p94 = por %p92, %p93
      %p96 = scmp.ne.s32.totalorder %s79, %s95
      %p97 = scmp.eq.s32.totalorder %s33, 0
      %p98 = por %p96, %p97
      %s99 = ssub.s32 %s35, %s42
      %p100 = scmp.eq.s32.totalorder %s99, 0
      %s102 = sadd.s32 %s101, 1
      %s103 = scalar_select %p100, %s101, %s102
      %p106 = pneg %p100
      %p107 = scmp.eq.s32.totalorder %s27, 5
      %p108 = por %p106, %p107
      %p109 = scmp.ne.s32.totalorder %s101, %s104
      %p110 = scmp.eq.s32.totalorder %s27, 0
      %p111 = por %p109, %p110
      %p112 = scmp.ne.s32.totalorder %s101, %s104
      %p113 = scmp.eq.s32.totalorder %s32, 5
      %p114 = por %p112, %p113
      %p115 = scmp.ne.s32.totalorder %s104, %s105
      %p116 = scmp.eq.s32.totalorder %s32, 0
      %p117 = por %p115, %p116
      %p118 = scmp.ne.s32.totalorder %s104, %s105
      %p119 = scmp.eq.s32.totalorder %s33, 5
      %p120 = por %p118, %p119
      %p122 = scmp.ne.s32.totalorder %s105, %s121
      %p123 = scmp.eq.s32.totalorder %s33, 0
      %p124 = por %p122, %p123
      %s125 = ssub.s32 %s35, %s42
      %p126 = scmp.eq.s32.totalorder %s125, 0
      %s128 = sadd.s32 %s127, 1
      %s129 = scalar_select %p126, %s127, %s128
      %p132 = pneg %p126
      %p133 = scmp.eq.s32.totalorder %s27, 5
      %p134 = por %p132, %p133
      %p135 = scmp.ne.s32.totalorder %s127, %s130
      %p136 = scmp.eq.s32.totalorder %s27, 0
      %p137 = por %p135, %p136
      %p138 = scmp.ne.s32.totalorder %s127, %s130
      %p139 = scmp.eq.s32.totalorder %s32, 5
      %p140 = por %p138, %p139
      %p141 = scmp.ne.s32.totalorder %s130, %s131
      %p142 = scmp.eq.s32.totalorder %s32, 0
      %p143 = por %p141, %p142
      %p144 = scmp.ne.s32.totalorder %s130, %s131
      %p145 = scmp.eq.s32.totalorder %s33, 5
      %p146 = por %p144, %p145
      %p148 = scmp.ne.s32.totalorder %s131, %s147
      %p149 = scmp.eq.s32.totalorder %s33, 0
      %p150 = por %p148, %p149
      %s152 = sadd.s32 %s151, 1
      %p155 = scmp.eq.s32.totalorder %s27, 5
      %p156 = scmp.ne.s32.totalorder %s151, %s153
      %p157 = scmp.eq.s32.totalorder %s27, 0
      %p158 = por %p156, %p157
      %p159 = scmp.ne.s32.totalorder %s151, %s153
      %p160 = scmp.eq.s32.totalorder %s32, 5
      %p161 = por %p159, %p160
      %p162 = scmp.ne.s32.totalorder %s153, %s154
      %p163 = scmp.eq.s32.totalorder %s32, 0
      %p164 = por %p162, %p163
      %p165 = scmp.ne.s32.totalorder %s153, %s154
      %p166 = scmp.eq.s32.totalorder %s33, 5
      %p167 = por %p165, %p166
      %p169 = scmp.ne.s32.totalorder %s154, %s168
      %p170 = scmp.eq.s32.totalorder %s33, 0
      %p171 = por %p169, %p170
      %s173 = sadd.s32 %s172, 1
      %p176 = scmp.eq.s32.totalorder %s27, 5
      %p177 = scmp.ne.s32.totalorder %s172, %s174
      %p178 = scmp.eq.s32.totalorder %s27, 0
      %p179 = por %p177, %p178
      %p180 = scmp.ne.s32.totalorder %s172, %s174
      %p181 = scmp.eq.s32.totalorder %s32, 5
      %p182 = por %p180, %p181
      %p183 = scmp.ne.s32.totalorder %s174, %s175
      %p184 = scmp.eq.s32.totalorder %s32, 0
      %p185 = por %p183, %p184
      %p186 = scmp.ne.s32.totalorder %s174, %s175
      %p187 = scmp.eq.s32.totalorder %s33, 5
      %p188 = por %p186, %p187
      %p190 = scmp.ne.s32.totalorder %s175, %s189
      %p191 = scmp.eq.s32.totalorder %s33, 0
      %p192 = por %p190, %p191
      %s194 = sadd.s32 %s193, 1
      %p197 = scmp.eq.s32.totalorder %s27, 5
      %p198 = scmp.ne.s32.totalorder %s193, %s195
      %p199 = scmp.eq.s32.totalorder %s27, 0
      %p200 = por %p198, %p199
      %p201 = scmp.ne.s32.totalorder %s193, %s195
      %p202 = scmp.eq.s32.totalorder %s32, 5
      %p203 = por %p201, %p202
      %p204 = scmp.ne.s32.totalorder %s195, %s196
      %p205 = scmp.eq.s32.totalorder %s32, 0
      %p206 = por %p204, %p205
      %p207 = scmp.ne.s32.totalorder %s195, %s196
      %p208 = scmp.eq.s32.totalorder %s33, 5
      %p209 = por %p207, %p208
      %p211 = scmp.ne.s32.totalorder %s196, %s210
      %p212 = scmp.eq.s32.totalorder %s33, 0
      %p213 = por %p211, %p212
      %s215 = sadd.s32 %s214, 1
      %p218 = scmp.eq.s32.totalorder %s27, 5
      %p219 = scmp.ne.s32.totalorder %s214, %s216
      %p220 = scmp.eq.s32.totalorder %s27, 0
      %p221 = por %p219, %p220
      %p222 = scmp.ne.s32.totalorder %s214, %s216
      %p223 = scmp.eq.s32.totalorder %s32, 5
      %p224 = por %p222, %p223
      %p225 = scmp.ne.s32.totalorder %s216, %s217
      %p226 = scmp.eq.s32.totalorder %s32, 0
      %p227 = por %p225, %p226
      %p228 = scmp.ne.s32.totalorder %s216, %s217
      %p229 = scmp.eq.s32.totalorder %s33, 5
      %p230 = por %p228, %p229
      %p232 = scmp.ne.s32.totalorder %s217, %s231
      %p233 = scmp.eq.s32.totalorder %s33, 0
      %p234 = por %p232, %p233
      %s236 = sadd.s32 %s235, 1
      %p239 = scmp.eq.s32.totalorder %s27, 5
      %p240 = scmp.ne.s32.totalorder %s235, %s237
      %p241 = scmp.eq.s32.totalorder %s27, 0
      %p242 = por %p240, %p241
      %p243 = scmp.ne.s32.totalorder %s235, %s237
      %p244 = scmp.eq.s32.totalorder %s32, 5
      %p245 = por %p243, %p244
      %p246 = scmp.ne.s32.totalorder %s237, %s238
      %p247 = scmp.eq.s32.totalorder %s32, 0
      %p248 = por %p246, %p247
      %p249 = scmp.ne.s32.totalorder %s237, %s238
      %p250 = scmp.eq.s32.totalorder %s33, 5
      %p251 = por %p249, %p250
      %p253 = scmp.ne.s32.totalorder %s238, %s252
      %p254 = scmp.eq.s32.totalorder %s33, 0
      %p255 = por %p253, %p254
      %s257 = sadd.s32 %s256, 1
      %p260 = scmp.eq.s32.totalorder %s27, 5
      %p261 = scmp.ne.s32.totalorder %s256, %s258
      %p262 = scmp.eq.s32.totalorder %s27, 0
      %p263 = por %p261, %p262
      %p264 = scmp.ne.s32.totalorder %s256, %s258
      %p265 = scmp.eq.s32.totalorder %s32, 5
      %p266 = por %p264, %p265
      %p267 = scmp.ne.s32.totalorder %s258, %s259
      %p268 = scmp.eq.s32.totalorder %s32, 0
      %p269 = por %p267, %p268
      %p270 = scmp.ne.s32.totalorder %s258, %s259
      %p271 = scmp.eq.s32.totalorder %s33, 5
      %p272 = por %p270, %p271
      %p274 = scmp.ne.s32.totalorder %s259, %s273
      %p275 = scmp.eq.s32.totalorder %s33, 0
      %p276 = por %p274, %p275
      %s278 = sadd.s32 %s277, 1
      %p281 = scmp.eq.s32.totalorder %s27, 5
      %p282 = scmp.ne.s32.totalorder %s277, %s279
      %p283 = scmp.eq.s32.totalorder %s27, 0
      %p284 = por %p282, %p283
      %p285 = scmp.ne.s32.totalorder %s277, %s279
      %p286 = scmp.eq.s32.totalorder %s32, 5
      %p287 = por %p285, %p286
      %p288 = scmp.ne.s32.totalorder %s279, %s280
      %p289 = scmp.eq.s32.totalorder %s32, 0
      %p290 = por %p288, %p289
      %p291 = scmp.ne.s32.totalorder %s279, %s280
      %p292 = scmp.eq.s32.totalorder %s33, 5
      %p293 = por %p291, %p292
      %p295 = scmp.ne.s32.totalorder %s280, %s294
      %p296 = scmp.eq.s32.totalorder %s33, 0
      %p297 = por %p295, %p296
      %s299 = sadd.s32 %s298, 1
      %p302 = scmp.eq.s32.totalorder %s27, 5
      %p303 = scmp.ne.s32.totalorder %s298, %s300
      %p304 = scmp.eq.s32.totalorder %s27, 0
      %p305 = por %p303, %p304
      %p306 = scmp.ne.s32.totalorder %s298, %s300
      %p307 = scmp.eq.s32.totalorder %s32, 5
      %p308 = por %p306, %p307
      %p309 = scmp.ne.s32.totalorder %s300, %s301
      %p310 = scmp.eq.s32.totalorder %s32, 0
      %p311 = por %p309, %p310
      %p312 = scmp.ne.s32.totalorder %s300, %s301
      %p313 = scmp.eq.s32.totalorder %s33, 5
      %p314 = por %p312, %p313
      %p316 = scmp.ne.s32.totalorder %s301, %s315
      %p317 = scmp.eq.s32.totalorder %s33, 0
      %p318 = por %p316, %p317
      %s320 = sadd.s32 %s319, 1
      %p323 = scmp.eq.s32.totalorder %s27, 5
      %p324 = scmp.ne.s32.totalorder %s319, %s321
      %p325 = scmp.eq.s32.totalorder %s27, 0
      %p326 = por %p324, %p325
      %p327 = scmp.ne.s32.totalorder %s319, %s321
      %p328 = scmp.eq.s32.totalorder %s32, 5
      %p329 = por %p327, %p328
      %p330 = scmp.ne.s32.totalorder %s321, %s322
      %p331 = scmp.eq.s32.totalorder %s32, 0
      %p332 = por %p330, %p331
      %p333 = scmp.ne.s32.totalorder %s321, %s322
      %p334 = scmp.eq.s32.totalorder %s33, 5
      %p335 = por %p333, %p334
      %p337 = scmp.ne.s32.totalorder %s322, %s336
      %p338 = scmp.eq.s32.totalorder %s33, 0
      %p339 = por %p337, %p338
      %s341 = sadd.s32 %s340, 1
      %p344 = scmp.eq.s32.totalorder %s27, 5
      %p345 = scmp.ne.s32.totalorder %s340, %s342
      %p346 = scmp.eq.s32.totalorder %s27, 0
      %p347 = por %p345, %p346
      %p348 = scmp.ne.s32.totalorder %s340, %s342
      %p349 = scmp.eq.s32.totalorder %s32, 5
      %p350 = por %p348, %p349
      %p351 = scmp.ne.s32.totalorder %s342, %s343
      %p352 = scmp.eq.s32.totalorder %s32, 0
      %p353 = por %p351, %p352
      %p354 = scmp.ne.s32.totalorder %s342, %s343
      %p355 = scmp.eq.s32.totalorder %s33, 5
      %p356 = por %p354, %p355
      %p358 = scmp.ne.s32.totalorder %s343, %s357
      %p359 = scmp.eq.s32.totalorder %s33, 0
      %p360 = por %p358, %p359
      %s362 = sadd.s32 %s361, 1
      %p365 = scmp.eq.s32.totalorder %s27, 5
      %p366 = scmp.ne.s32.totalorder %s361, %s363
      %p367 = scmp.eq.s32.totalorder %s27, 0
      %p368 = por %p366, %p367
      %p369 = scmp.ne.s32.totalorder %s361, %s363
      %p370 = scmp.eq.s32.totalorder %s32, 5
      %p371 = por %p369, %p370
      %p372 = scmp.ne.s32.totalorder %s363, %s364
      %p373 = scmp.eq.s32.totalorder %s32, 0
      %p374 = por %p372, %p373
      %p375 = scmp.ne.s32.totalorder %s363, %s364
      %p376 = scmp.eq.s32.totalorder %s33, 5
      %p377 = por %p375, %p376
      %p379 = scmp.ne.s32.totalorder %s364, %s378
      %p380 = scmp.eq.s32.totalorder %s33, 0
      %p381 = por %p379, %p380
      %s383 = sadd.s32 %s382, 1
      %p386 = scmp.eq.s32.totalorder %s27, 5
      %p387 = scmp.ne.s32.totalorder %s382, %s384
      %p388 = scmp.eq.s32.totalorder %s27, 0
      %p389 = por %p387, %p388
      %p390 = scmp.ne.s32.totalorder %s382, %s384
      %p391 = scmp.eq.s32.totalorder %s32, 5
      %p392 = por %p390, %p391
      %p393 = scmp.ne.s32.totalorder %s384, %s385
      %p394 = scmp.eq.s32.totalorder %s32, 0
      %p395 = por %p393, %p394
      %p396 = scmp.ne.s32.totalorder %s384, %s385
      %p397 = scmp.eq.s32.totalorder %s33, 5
      %p398 = por %p396, %p397
      %p400 = scmp.ne.s32.totalorder %s385, %s399
      %p401 = scmp.eq.s32.totalorder %s33, 0
      %p402 = por %p400, %p401
      %s403 = ssub.s32 %s34, %s46
      %p404 = scmp.eq.s32.totalorder %s403, 0
      %s406 = sadd.s32 %s405, 1
      %s407 = scalar_select %p404, %s405, %s406
      %p410 = pneg %p404
      %p411 = scmp.eq.s32.totalorder %s27, 5
      %p412 = por %p410, %p411
      %p413 = scmp.ne.s32.totalorder %s405, %s408
      %p414 = scmp.eq.s32.totalorder %s27, 0
      %p415 = por %p413, %p414
      %p416 = scmp.ne.s32.totalorder %s405, %s408
      %p417 = scmp.eq.s32.totalorder %s32, 5
      %p418 = por %p416, %p417
      %p419 = scmp.ne.s32.totalorder %s408, %s409
      %p420 = scmp.eq.s32.totalorder %s32, 0
      %p421 = por %p419, %p420
      %p422 = scmp.ne.s32.totalorder %s408, %s409
      %p423 = scmp.eq.s32.totalorder %s33, 5
      %p424 = por %p422, %p423
      %p426 = scmp.ne.s32.totalorder %s409, %s425
      %p427 = scmp.eq.s32.totalorder %s33, 0
      %p428 = por %p426, %p427
      %p429 = scmp.le.s32.totalorder 1, %s27
      %p430 = scmp.lt.s32.totalorder %s27, 7
      %p431 = pnand %p429, %p430
      %p432 = pneg %p431
      // Predicated region
      $region9: #{tpu_custom_call.1} parent=5 // pred_check
        _
      $region10: #{tpu_custom_call.1} parent=5 // pred_check_branch
        %434 = sbr.rel (%p431) target = $region12
      $region11: #{tpu_custom_call.1} parent=5 // pred_region
        %s435 = ssub.s32 %s27, 1
        // Predicated region
        $region13: #{tpu_custom_call.1} parent=11 // pred_check
          %p436 = pneg %p164
        $region14: #{tpu_custom_call.1} parent=11 // pred_check_branch
          %438 = sbr.rel (%p436) target = $region16
        $region15: #{tpu_custom_call.1} parent=11 // pred_region
          _
        $region16: #{tpu_custom_call.1} parent=11 // pred_fallthru
          _
        // Predicated region
        $region17: #{tpu_custom_call.1} parent=11 // pred_check
          %p439 = pneg %p185
        $region18: #{tpu_custom_call.1} parent=11 // pred_check_branch
          %441 = sbr.rel (%p439) target = $region20
        $region19: #{tpu_custom_call.1} parent=11 // pred_region
          _
        $region20: #{tpu_custom_call.1} parent=11 // pred_fallthru
          _
        // Predicated region
        $region21: #{tpu_custom_call.1} parent=11 // pred_check
          %p442 = pneg %p206
        $region22: #{tpu_custom_call.1} parent=11 // pred_check_branch
          %444 = sbr.rel (%p442) target = $region24
        $region23: #{tpu_custom_call.1} parent=11 // pred_region
          _
        $region24: #{tpu_custom_call.1} parent=11 // pred_fallthru
          _
        // Predicated region
        $region25: #{tpu_custom_call.1} parent=11 // pred_check
          %p445 = pneg %p227
        $region26: #{tpu_custom_call.1} parent=11 // pred_check_branch
          %447 = sbr.rel (%p445) target = $region28
        $region27: #{tpu_custom_call.1} parent=11 // pred_region
          _
        $region28: #{tpu_custom_call.1} parent=11 // pred_fallthru
          _
        // Predicated region
        $region29: #{tpu_custom_call.1} parent=11 // pred_check
          %p448 = pneg %p248
        $region30: #{tpu_custom_call.1} parent=11 // pred_check_branch
          %450 = sbr.rel (%p448) target = $region32
        $region31: #{tpu_custom_call.1} parent=11 // pred_region
          _
        $region32: #{tpu_custom_call.1} parent=11 // pred_fallthru
          _
        // Predicated region
        $region33: #{tpu_custom_call.1} parent=11 // pred_check
          %p451 = pneg %p269
        $region34: #{tpu_custom_call.1} parent=11 // pred_check_branch
          %453 = sbr.rel (%p451) target = $region36
        $region35: #{tpu_custom_call.1} parent=11 // pred_region
          _
        $region36: #{tpu_custom_call.1} parent=11 // pred_fallthru
          _
        // Predicated region
        $region37: #{tpu_custom_call.1} parent=11 // pred_check
          %p454 = pneg %p290
        $region38: #{tpu_custom_call.1} parent=11 // pred_check_branch
          %456 = sbr.rel (%p454) target = $region40
        $region39: #{tpu_custom_call.1} parent=11 // pred_region
          _
        $region40: #{tpu_custom_call.1} parent=11 // pred_fallthru
          _
        // Predicated region
        $region41: #{tpu_custom_call.1} parent=11 // pred_check
          %p457 = pneg %p311
        $region42: #{tpu_custom_call.1} parent=11 // pred_check_branch
          %459 = sbr.rel (%p457) target = $region44
        $region43: #{tpu_custom_call.1} parent=11 // pred_region
          _
        $region44: #{tpu_custom_call.1} parent=11 // pred_fallthru
          _
        // Predicated region
        $region45: #{tpu_custom_call.1} parent=11 // pred_check
          %p460 = pneg %p332
        $region46: #{tpu_custom_call.1} parent=11 // pred_check_branch
          %462 = sbr.rel (%p460) target = $region48
        $region47: #{tpu_custom_call.1} parent=11 // pred_region
          _
        $region48: #{tpu_custom_call.1} parent=11 // pred_fallthru
          _
        // Predicated region
        $region49: #{tpu_custom_call.1} parent=11 // pred_check
          %p463 = pneg %p353
        $region50: #{tpu_custom_call.1} parent=11 // pred_check_branch
          %465 = sbr.rel (%p463) target = $region52
        $region51: #{tpu_custom_call.1} parent=11 // pred_region
          _
        $region52: #{tpu_custom_call.1} parent=11 // pred_fallthru
          _
        // Predicated region
        $region53: #{tpu_custom_call.1} parent=11 // pred_check
          %p466 = pneg %p374
        $region54: #{tpu_custom_call.1} parent=11 // pred_check_branch
          %468 = sbr.rel (%p466) target = $region56
        $region55: #{tpu_custom_call.1} parent=11 // pred_region
          _
        $region56: #{tpu_custom_call.1} parent=11 // pred_fallthru
          _
        // Predicated region
        $region57: #{tpu_custom_call.1} parent=11 // pred_check
          %p469 = pneg %p395
        $region58: #{tpu_custom_call.1} parent=11 // pred_check_branch
          %471 = sbr.rel (%p469) target = $region60
        $region59: #{tpu_custom_call.1} parent=11 // pred_region
          _
        $region60: #{tpu_custom_call.1} parent=11 // pred_fallthru
          _
      $region12: #{tpu_custom_call.1} parent=5 // pred_fallthru
        _
      %p472 = scmp.lt.s32.totalorder %s27, 6
      // Predicated region
      $region61: #{tpu_custom_call.1} parent=5 // pred_check
        %p473 = pneg %p472
      $region62: #{tpu_custom_call.1} parent=5 // pred_check_branch
        %475 = sbr.rel (%p473) target = $region64
      $region63: #{tpu_custom_call.1} parent=5 // pred_region
        // Predicated region
        $region65: #{tpu_custom_call.1} parent=63 // pred_check
          %p476 = pneg %p59
        $region66: #{tpu_custom_call.1} parent=63 // pred_check_branch
          %478 = sbr.rel (%p476) target = $region68
        $region67: #{tpu_custom_call.1} parent=63 // pred_region
          %s479 = smul.u32 4, %s34
          %p480 = scmp.lt.s32.totalorder %s479, 7
          %s481 = scalar_select %p480, %s479, 7
          %s482 = smul.addr %s481, 8
          %s483 = scalar_lea.vmem %s0, %s482
          %s484 = smul.u32 4, %s34
        $region68: #{tpu_custom_call.1} parent=63 // pred_fallthru
          _
        // Predicated region
        $region69: #{tpu_custom_call.1} parent=63 // pred_check
          %p485 = pneg %p85
        $region70: #{tpu_custom_call.1} parent=63 // pred_check_branch
          %487 = sbr.rel (%p485) target = $region72
        $region71: #{tpu_custom_call.1} parent=63 // pred_region
          %s488 = smul.u32 16, %s35
          %p489 = scmp.lt.s32.totalorder %s488, 47
          %s490 = scalar_select %p489, %s488, 47
          %s491 = smul.addr %s490, 8
          %s492 = scalar_lea.vmem %s1, %s491
          %s493 = smul.u32 16, %s35
        $region72: #{tpu_custom_call.1} parent=63 // pred_fallthru
          _
        // Predicated region
        $region73: #{tpu_custom_call.1} parent=63 // pred_check
          %p494 = pneg %p111
        $region74: #{tpu_custom_call.1} parent=63 // pred_check_branch
          %496 = sbr.rel (%p494) target = $region76
        $region75: #{tpu_custom_call.1} parent=63 // pred_region
          %s497 = smul.u32 16, %s35
          %p498 = scmp.lt.s32.totalorder %s497, 47
          %s499 = scalar_select %p498, %s497, 47
          %s500 = smul.addr %s499, 8
          %s501 = scalar_lea.vmem %s2, %s500
          %s502 = smul.u32 16, %s35
        $region76: #{tpu_custom_call.1} parent=63 // pred_fallthru
          _
        // Predicated region
        $region77: #{tpu_custom_call.1} parent=63 // pred_check
          %p503 = pneg %p137
        $region78: #{tpu_custom_call.1} parent=63 // pred_check_branch
          %505 = sbr.rel (%p503) target = $region80
        $region79: #{tpu_custom_call.1} parent=63 // pred_region
          %p506 = scmp.lt.s32.totalorder %s35, 2
          %s507 = scalar_select %p506, %s35, 2
          %s508 = scalar_lea.vmem %s3, %s507
        $region80: #{tpu_custom_call.1} parent=63 // pred_fallthru
          _
      $region64: #{tpu_custom_call.1} parent=5 // pred_fallthru
        _
      %p509 = scmp.le.s32.totalorder 1, %s27
      %p510 = scmp.lt.s32.totalorder %s27, 7
      %p511 = pnand %p509, %p510
      %p512 = pneg %p511
      // Predicated region
      $region81: #{tpu_custom_call.1} parent=5 // pred_check
        _
      $region82: #{tpu_custom_call.1} parent=5 // pred_check_branch
        %514 = sbr.rel (%p511) target = $region84
      $region83: #{tpu_custom_call.1} parent=5 // pred_region
        %s515 = ssub.s32 %s27, 1
        %s516 = smul.u32 4, %s36
        %p517 = scmp.lt.s32.totalorder %s516, 7
        %s518 = scalar_select %p517, %s516, 7
        %s519 = smul.addr %s518, 8
        %s520 = scalar_lea.vmem %s0, %s519
        %p521 = pneg %p65
        %p522 = pneg %p62
        %s523 = smul.u32 16, %s37
        %p524 = scmp.lt.s32.totalorder %s523, 47
        %s525 = scalar_select %p524, %s523, 47
        %s526 = smul.addr %s525, 8
        %s527 = scalar_lea.vmem %s1, %s526
        %p528 = pneg %p91
        %p529 = pneg %p88
        %s530 = smul.u32 16, %s37
        %p531 = scmp.lt.s32.totalorder %s530, 47
        %s532 = scalar_select %p531, %s530, 47
        %s533 = smul.addr %s532, 8
        %s534 = scalar_lea.vmem %s2, %s533
        %p535 = pneg %p117
        %p536 = pneg %p114
        %p537 = scmp.lt.s32.totalorder %s37, 2
        %s538 = scalar_select %p537, %s37, 2
        %s539 = scalar_lea.vmem %s3, %s538
        %p540 = pneg %p143
        %p541 = pneg %p140
        %p542 = pneg %p164
        %p543 = pneg %p161
        %p544 = pneg %p185
        %p545 = pneg %p182
        %p546 = pneg %p206
        %p547 = pneg %p203
        %p548 = pneg %p227
        %p549 = pneg %p224
        %p550 = pneg %p248
        %p551 = pneg %p245
        %p552 = pneg %p269
        %p553 = pneg %p266
        %p554 = pneg %p290
        %p555 = pneg %p287
        %p556 = pneg %p311
        %p557 = pneg %p308
        %p558 = pneg %p332
        %p559 = pneg %p329
        %p560 = pneg %p353
        %p561 = pneg %p350
        %p562 = pneg %p374
        %p563 = pneg %p371
        %p564 = pneg %p395
        %p565 = pneg %p392
        %p566 = pneg %p421
        %p567 = pneg %p418
        %s568 = sand.u32 %s408, 1
        %s569 = scalar_lea.sflag [#allocation5], %s568
        %s570 = sand.u32 %s408, 1
        %s571 = smul.addr %s570, 32
        %s572 = scalar_lea.vmem [#allocation4], %s571
        %s573 = smul.u32 4, %s36
        %p574 = scmp.lt.s32.totalorder %s573, 7
        %s575 = scalar_select %p574, %s573, 7
        %s576 = smul.addr %s575, 8
        %s577 = scalar_lea.vmem %s0, %s576
        %s578 = smul.u32 4, %s36
        %s579 = smul.u32 16, %s37
        %p580 = scmp.lt.s32.totalorder %s579, 47
        %s581 = scalar_select %p580, %s579, 47
        %s582 = smul.addr %s581, 8
        %s583 = scalar_lea.vmem %s1, %s582
        %s584 = smul.u32 16, %s37
        %s585 = smul.u32 16, %s37
        %p586 = scmp.lt.s32.totalorder %s585, 47
        %s587 = scalar_select %p586, %s585, 47
        %s588 = smul.addr %s587, 8
        %s589 = scalar_lea.vmem %s2, %s588
        %s590 = smul.u32 16, %s37
        %p591 = scmp.lt.s32.totalorder %s37, 2
        %s592 = scalar_select %p591, %s37, 2
        %s593 = scalar_lea.vmem %s3, %s592
        %s594 = smul.u32 4, %s36
        %p595 = scmp.eq.s32.totalorder %s37, 0
        // Predicated region
        $region85: #{tpu_custom_call.1} parent=83 // pred_check
          %p596 = pneg %p595
        $region86: #{tpu_custom_call.1} parent=83 // pred_check_branch
          %598 = sbr.rel (%p596) target = $region88
        $region87: #{tpu_custom_call.1} parent=83 // pred_region
          %vm599 = vcmask 138240
          %600 = vst.msk [vmem:[#allocation2] sm:$0xff] %vm599, 0.0
          %601 = vst.msk [vmem:[#allocation2 + $0x8] sm:$0xff] %vm599, 0.0
          %602 = vst.msk [vmem:[#allocation2 + $0x10] sm:$0xff] %vm599, 0.0
          %603 = vst.msk [vmem:[#allocation2 + $0x18] sm:$0xff] %vm599, 0.0
        $region88: #{tpu_custom_call.1} parent=83 // pred_fallthru
          _
        %v604 = vld [vmem:[%s583] sm:$0xff]
        %v605 = vld [vmem:[%s583 + $0x8] sm:$0xff]
        %v606 = vld [vmem:[%s583 + $0x10] sm:$0xff]
        %v607 = vld [vmem:[%s583 + $0x18] sm:$0xff]
        %v608 = vld [vmem:[%s583 + $0x20] sm:$0xff]
        %v609 = vld [vmem:[%s583 + $0x28] sm:$0xff]
        %v610 = vld [vmem:[%s583 + $0x30] sm:$0xff]
        %v611 = vld [vmem:[%s583 + $0x38] sm:$0xff]
        %v612 = vld [vmem:[%s583 + $0x40] sm:$0xff]
        %v613 = vld [vmem:[%s583 + $0x48] sm:$0xff]
        %v614 = vld [vmem:[%s583 + $0x50] sm:$0xff]
        %v615 = vld [vmem:[%s583 + $0x58] sm:$0xff]
        %v616 = vld [vmem:[%s583 + $0x60] sm:$0xff]
        %v617 = vld [vmem:[%s583 + $0x68] sm:$0xff]
        %v618 = vld [vmem:[%s583 + $0x70] sm:$0xff]
        %v619 = vld [vmem:[%s583 + $0x78] sm:$0xff]
        %v620 = vld [vmem:[%s4] sm:$0xff]
        %v621 = vld [vmem:[%s5] sm:$0x1]
        %v623 = vlaneseq
        %v624 = vshrl.u32 %v623, 7
        %v625 = vsub.s32 0, %v624
        %v626 = vrot.slane %v621, %v625
        %vm628 = vcmask 64512
        %v630 = vsel %vm628, %v604, 0
        %v633 = vsel %vm628, %v605, 0
        %v636 = vsel %vm628, %v606, 0
        %v639 = vsel %vm628, %v607, 0
        %v642 = vsel %vm628, %v608, 0
        %v645 = vsel %vm628, %v609, 0
        %v648 = vsel %vm628, %v610, 0
        %v651 = vsel %vm628, %v611, 0
        %v654 = vsel %vm628, %v612, 0
        %v657 = vsel %vm628, %v613, 0
        %v660 = vsel %vm628, %v614, 0
        %v663 = vsel %vm628, %v615, 0
        %v666 = vsel %vm628, %v616, 0
        %v669 = vsel %vm628, %v617, 0
        %v672 = vsel %vm628, %v618, 0
        %v675 = vsel %vm628, %v619, 0
        %677 = vmatprep.subr.mxu0 0.0
        %678 = vmatpush1.msra.mxu0 %v620
        %679 = vmatprep.subr.mxu0 0.0
        %680 = vmatpush1.msra.mxu0 0.0
        %681 = vmatprep.subr.mxu0 0.0
        %682 = vmatpush1.msra.mxu0 0.0
        %683 = vmatprep.subr.mxu0 0.0
        %684 = vmatpush1.msra.mxu0 0.0
        %685 = vmatprep.subr.mxu0 0.0
        %686 = vmatpush1.msra.mxu0 0.0
        %687 = vmatprep.subr.mxu0 0.0
        %688 = vmatpush1.msra.mxu0 0.0
        %689 = vmatprep.subr.mxu0 0.0
        %690 = vmatpush1.msra.mxu0 0.0
        %691 = vmatprep.subr.mxu0 0.0
        %692 = vmatpush1.msra.mxu0 0.0
        %693 = vmatprep.subr.mxu0 0.0
        %694 = vmatpush1.msra.mxu0 0.0
        %695 = vmatprep.subr.mxu0 0.0
        %696 = vmatpush1.msra.mxu0 0.0
        %697 = vmatprep.subr.mxu0 0.0
        %698 = vmatpush1.msra.mxu0 0.0
        %699 = vmatprep.subr.mxu0 0.0
        %700 = vmatpush1.msra.mxu0 0.0
        %701 = vmatprep.subr.mxu0 0.0
        %702 = vmatpush1.msra.mxu0 0.0
        %703 = vmatprep.subr.mxu0 0.0
        %704 = vmatpush1.msra.mxu0 0.0
        %705 = vmatprep.subr.mxu0 0.0
        %706 = vmatpush1.msra.mxu0 0.0
        %707 = vmatprep.subr.mxu0 0.0
        %708 = vmatpush1.msra.mxu0 0.0
        %709 = vmatprep.subr.mxu0 0.0
        %710 = vmatpush1.msra.mxu0 0.0
        %711 = vmatprep.subr.mxu0 0.0
        %712 = vmatpush1.msra.mxu0 0.0
        %713 = vmatprep.subr.mxu0 0.0
        %714 = vmatpush1.msra.mxu0 0.0
        %715 = vmatprep.subr.mxu0 0.0
        %716 = vmatpush1.msra.mxu0 0.0
        %717 = vmatprep.subr.mxu0 0.0
        %718 = vmatpush1.msra.mxu0 0.0
        %719 = vmatprep.subr.mxu0 0.0
        %720 = vmatpush1.msra.mxu0 0.0
        %721 = vmatprep.subr.mxu0 0.0
        %722 = vmatpush1.msra.mxu0 0.0
        %723 = vmatprep.subr.mxu0 0.0
        %724 = vmatpush1.msra.mxu0 0.0
        %725 = vmatprep.subr.mxu0 0.0
        %726 = vmatpush1.msra.mxu0 0.0
        %727 = vmatprep.subr.mxu0 0.0
        %728 = vmatpush1.msra.mxu0 0.0
        %729 = vmatprep.subr.mxu0 0.0
        %730 = vmatpush1.msra.mxu0 0.0
        %731 = vmatprep.subr.mxu0 0.0
        %732 = vmatpush1.msra.mxu0 0.0
        %733 = vmatprep.subr.mxu0 0.0
        %734 = vmatpush1.msra.mxu0 0.0
        %735 = vmatprep.subr.mxu0 0.0
        %736 = vmatpush1.msra.mxu0 0.0
        %737 = vmatprep.subr.mxu0 0.0
        %738 = vmatpush1.msra.mxu0 0.0
        %739 = vmatprep.subr.mxu0 0.0
        %740 = vmatpush1.msra.mxu0 0.0
        %741 = vmatprep.mubr.f32.mxu0 0.0
        %742 = vmatmul.mubr.f32.gmra.mrb[0].mxu0 %v630
        %v743 = vpop.f32.mrb[0].mxu0
        %v744 = vadd.f32 %v626, %v743
        %v745 = vpop.f32.mrb[0].mxu0
        %746 = vmatprep.mubr.f32.mxu0 0.0
        %747 = vmatmul.mubr.f32.gmra.mrb[0].mxu0 %v633
        %v748 = vpop.f32.mrb[0].mxu0
        %v749 = vadd.f32 %v626, %v748
        %v750 = vpop.f32.mrb[0].mxu0
        %751 = vmatprep.mubr.f32.mxu0 0.0
        %752 = vmatmul.mubr.f32.gmra.mrb[0].mxu0 %v636
        %v753 = vpop.f32.mrb[0].mxu0
        %v754 = vadd.f32 %v626, %v753
        %v755 = vpop.f32.mrb[0].mxu0
        %756 = vmatprep.mubr.f32.mxu0 0.0
        %757 = vmatmul.mubr.f32.gmra.mrb[0].mxu0 %v639
        %v758 = vpop.f32.mrb[0].mxu0
        %v759 = vadd.f32 %v626, %v758
        %v760 = vpop.f32.mrb[0].mxu0
        %761 = vmatprep.mubr.f32.mxu0 0.0
        %762 = vmatmul.mubr.f32.gmra.mrb[0].mxu0 %v642
        %v763 = vpop.f32.mrb[0].mxu0
        %v764 = vadd.f32 %v626, %v763
        %v765 = vpop.f32.mrb[0].mxu0
        %766 = vmatprep.mubr.f32.mxu0 0.0
        %767 = vmatmul.mubr.f32.gmra.mrb[0].mxu0 %v645
        %v768 = vpop.f32.mrb[0].mxu0
        %v769 = vadd.f32 %v626, %v768
        %v770 = vpop.f32.mrb[0].mxu0
        %771 = vmatprep.mubr.f32.mxu0 0.0
        %772 = vmatmul.mubr.f32.gmra.mrb[0].mxu0 %v648
        %v773 = vpop.f32.mrb[0].mxu0
        %v774 = vadd.f32 %v626, %v773
        %v775 = vpop.f32.mrb[0].mxu0
        %776 = vmatprep.mubr.f32.mxu0 0.0
        %777 = vmatmul.mubr.f32.gmra.mrb[0].mxu0 %v651
        %v778 = vpop.f32.mrb[0].mxu0
        %v779 = vadd.f32 %v626, %v778
        %v780 = vpop.f32.mrb[0].mxu0
        %781 = vmatprep.mubr.f32.mxu0 0.0
        %782 = vmatmul.mubr.f32.gmra.mrb[0].mxu0 %v654
        %v783 = vpop.f32.mrb[0].mxu0
        %v784 = vadd.f32 %v626, %v783
        %v785 = vpop.f32.mrb[0].mxu0
        %786 = vmatprep.mubr.f32.mxu0 0.0
        %787 = vmatmul.mubr.f32.gmra.mrb[0].mxu0 %v657
        %v788 = vpop.f32.mrb[0].mxu0
        %v789 = vadd.f32 %v626, %v788
        %v790 = vpop.f32.mrb[0].mxu0
        %791 = vmatprep.mubr.f32.mxu0 0.0
        %792 = vmatmul.mubr.f32.gmra.mrb[0].mxu0 %v660
        %v793 = vpop.f32.mrb[0].mxu0
        %v794 = vadd.f32 %v626, %v793
        %v795 = vpop.f32.mrb[0].mxu0
        %796 = vmatprep.mubr.f32.mxu0 0.0
        %797 = vmatmul.mubr.f32.gmra.mrb[0].mxu0 %v663
        %v798 = vpop.f32.mrb[0].mxu0
        %v799 = vadd.f32 %v626, %v798
        %v800 = vpop.f32.mrb[0].mxu0
        %801 = vmatprep.mubr.f32.mxu0 0.0
        %802 = vmatmul.mubr.f32.gmra.mrb[0].mxu0 %v666
        %v803 = vpop.f32.mrb[0].mxu0
        %v804 = vadd.f32 %v626, %v803
        %v805 = vpop.f32.mrb[0].mxu0
        %806 = vmatprep.mubr.f32.mxu0 0.0
        %807 = vmatmul.mubr.f32.gmra.mrb[0].mxu0 %v669
        %v808 = vpop.f32.mrb[0].mxu0
        %v809 = vadd.f32 %v626, %v808
        %v810 = vpop.f32.mrb[0].mxu0
        %811 = vmatprep.mubr.f32.mxu0 0.0
        %812 = vmatmul.mubr.f32.gmra.mrb[0].mxu0 %v672
        %v813 = vpop.f32.mrb[0].mxu0
        %v814 = vadd.f32 %v626, %v813
        %v815 = vpop.f32.mrb[0].mxu0
        %816 = vmatprep.mubr.f32.mxu0 0.0
        %817 = vmatmul.mubr.f32.gmra.mrb[0].mxu0 %v675
        %v818 = vpop.f32.mrb[0].mxu0
        %v819 = vadd.f32 %v626, %v818
        %v820 = vpop.f32.mrb[0].mxu0
        %821 = vdwg.mxu0
        %v822 = vmax.f32 %v744, 0.0
        %v823 = vmax.f32 %v749, 0.0
        %v824 = vmax.f32 %v754, 0.0
        %v825 = vmax.f32 %v759, 0.0
        %v826 = vmax.f32 %v764, 0.0
        %v827 = vmax.f32 %v769, 0.0
        %v828 = vmax.f32 %v774, 0.0
        %v829 = vmax.f32 %v779, 0.0
        %v830 = vmax.f32 %v784, 0.0
        %v831 = vmax.f32 %v789, 0.0
        %v832 = vmax.f32 %v794, 0.0
        %v833 = vmax.f32 %v799, 0.0
        %v834 = vmax.f32 %v804, 0.0
        %v835 = vmax.f32 %v809, 0.0
        %v836 = vmax.f32 %v814, 0.0
        %v837 = vmax.f32 %v819, 0.0
        %v838 = vld [vmem:[%s6] sm:$0xff]
        %v839 = vld [vmem:[%s6 + $0x8] sm:$0xff]
        %v840 = vld [vmem:[%s7] sm:$0x1]
        %v842 = vlaneseq
        %v843 = vshrl.u32 %v842, 7
        %v844 = vsub.s32 0, %v843
        %v845 = vrot.slane %v840, %v844
        %vm847 = vcmask 130048
        %v849 = vsel %vm847, %v822, 0
        %v852 = vsel %vm847, %v823, 0
        %v855 = vsel %vm847, %v824, 0
        %v858 = vsel %vm847, %v825, 0
        %v861 = vsel %vm847, %v826, 0
        %v864 = vsel %vm847, %v827, 0
        %v867 = vsel %vm847, %v828, 0
        %v870 = vsel %vm847, %v829, 0
        %v873 = vsel %vm847, %v830, 0
        %v876 = vsel %vm847, %v831, 0
        %v879 = vsel %vm847, %v832, 0
        %v882 = vsel %vm847, %v833, 0
        %v885 = vsel %vm847, %v834, 0
        %v888 = vsel %vm847, %v835, 0
        %v891 = vsel %vm847, %v836, 0
        %v894 = vsel %vm847, %v837, 0
        %896 = vmatprep.subr.mxu0 0.0
        %897 = vmatpush1.msra.mxu0 %v838
        %898 = vmatprep.subr.mxu0 0.0
        %899 = vmatpush1.msra.mxu0 %v839
        %900 = vmatprep.subr.mxu0 0.0
        %901 = vmatpush1.msra.mxu0 0.0
        %902 = vmatprep.subr.mxu0 0.0
        %903 = vmatpush1.msra.mxu0 0.0
        %904 = vmatprep.subr.mxu0 0.0
        %905 = vmatpush1.msra.mxu0 0.0
        %906 = vmatprep.subr.mxu0 0.0
        %907 = vmatpush1.msra.mxu0 0.0
        %908 = vmatprep.subr.mxu0 0.0
        %909 = vmatpush1.msra.mxu0 0.0
        %910 = vmatprep.subr.mxu0 0.0
        %911 = vmatpush1.msra.mxu0 0.0
        %912 = vmatprep.subr.mxu0 0.0
        %913 = vmatpush1.msra.mxu0 0.0
        %914 = vmatprep.subr.mxu0 0.0
        %915 = vmatpush1.msra.mxu0 0.0
        %916 = vmatprep.subr.mxu0 0.0
        %917 = vmatpush1.msra.mxu0 0.0
        %918 = vmatprep.subr.mxu0 0.0
        %919 = vmatpush1.msra.mxu0 0.0
        %920 = vmatprep.subr.mxu0 0.0
        %921 = vmatpush1.msra.mxu0 0.0
        %922 = vmatprep.subr.mxu0 0.0
        %923 = vmatpush1.msra.mxu0 0.0
        %924 = vmatprep.subr.mxu0 0.0
        %925 = vmatpush1.msra.mxu0 0.0
        %926 = vmatprep.subr.mxu0 0.0
        %927 = vmatpush1.msra.mxu0 0.0
        %928 = vmatprep.subr.mxu0 0.0
        %929 = vmatpush1.msra.mxu0 0.0
        %930 = vmatprep.subr.mxu0 0.0
        %931 = vmatpush1.msra.mxu0 0.0
        %932 = vmatprep.subr.mxu0 0.0
        %933 = vmatpush1.msra.mxu0 0.0
        %934 = vmatprep.subr.mxu0 0.0
        %935 = vmatpush1.msra.mxu0 0.0
        %936 = vmatprep.subr.mxu0 0.0
        %937 = vmatpush1.msra.mxu0 0.0
        %938 = vmatprep.subr.mxu0 0.0
        %939 = vmatpush1.msra.mxu0 0.0
        %940 = vmatprep.subr.mxu0 0.0
        %941 = vmatpush1.msra.mxu0 0.0
        %942 = vmatprep.subr.mxu0 0.0
        %943 = vmatpush1.msra.mxu0 0.0
        %944 = vmatprep.subr.mxu0 0.0
        %945 = vmatpush1.msra.mxu0 0.0
        %946 = vmatprep.subr.mxu0 0.0
        %947 = vmatpush1.msra.mxu0 0.0
        %948 = vmatprep.subr.mxu0 0.0
        %949 = vmatpush1.msra.mxu0 0.0
        %950 = vmatprep.subr.mxu0 0.0
        %951 = vmatpush1.msra.mxu0 0.0
        %952 = vmatprep.subr.mxu0 0.0
        %953 = vmatpush1.msra.mxu0 0.0
        %954 = vmatprep.subr.mxu0 0.0
        %955 = vmatpush1.msra.mxu0 0.0
        %956 = vmatprep.subr.mxu0 0.0
        %957 = vmatpush1.msra.mxu0 0.0
        %958 = vmatprep.subr.mxu0 0.0
        %959 = vmatpush1.msra.mxu0 0.0
        %960 = vmatprep.mubr.f32.mxu0 0.0
        %961 = vmatmul.mubr.f32.gmra.mrb[0].mxu0 %v849
        %v962 = vpop.f32.mrb[0].mxu0
        %v963 = vadd.f32 %v845, %v962
        %v964 = vpop.f32.mrb[0].mxu0
        %965 = vmatprep.mubr.f32.mxu0 0.0
        %966 = vmatmul.mubr.f32.gmra.mrb[0].mxu0 %v852
        %v967 = vpop.f32.mrb[0].mxu0
        %v968 = vadd.f32 %v845, %v967
        %v969 = vpop.f32.mrb[0].mxu0
        %970 = vmatprep.mubr.f32.mxu0 0.0
        %971 = vmatmul.mubr.f32.gmra.mrb[0].mxu0 %v855
        %v972 = vpop.f32.mrb[0].mxu0
        %v973 = vadd.f32 %v845, %v972
        %v974 = vpop.f32.mrb[0].mxu0
        %975 = vmatprep.mubr.f32.mxu0 0.0
        %976 = vmatmul.mubr.f32.gmra.mrb[0].mxu0 %v858
        %v977 = vpop.f32.mrb[0].mxu0
        %v978 = vadd.f32 %v845, %v977
        %v979 = vpop.f32.mrb[0].mxu0
        %980 = vmatprep.mubr.f32.mxu0 0.0
        %981 = vmatmul.mubr.f32.gmra.mrb[0].mxu0 %v861
        %v982 = vpop.f32.mrb[0].mxu0
        %v983 = vadd.f32 %v845, %v982
        %v984 = vpop.f32.mrb[0].mxu0
        %985 = vmatprep.mubr.f32.mxu0 0.0
        %986 = vmatmul.mubr.f32.gmra.mrb[0].mxu0 %v864
        %v987 = vpop.f32.mrb[0].mxu0
        %v988 = vadd.f32 %v845, %v987
        %v989 = vpop.f32.mrb[0].mxu0
        %990 = vmatprep.mubr.f32.mxu0 0.0
        %991 = vmatmul.mubr.f32.gmra.mrb[0].mxu0 %v867
        %v992 = vpop.f32.mrb[0].mxu0
        %v993 = vadd.f32 %v845, %v992
        %v994 = vpop.f32.mrb[0].mxu0
        %995 = vmatprep.mubr.f32.mxu0 0.0
        %996 = vmatmul.mubr.f32.gmra.mrb[0].mxu0 %v870
        %v997 = vpop.f32.mrb[0].mxu0
        %v998 = vadd.f32 %v845, %v997
        %v999 = vpop.f32.mrb[0].mxu0
        %1000 = vmatprep.mubr.f32.mxu0 0.0
        %1001 = vmatmul.mubr.f32.gmra.mrb[0].mxu0 %v873
        %v1002 = vpop.f32.mrb[0].mxu0
        %v1003 = vadd.f32 %v845, %v1002
        %v1004 = vpop.f32.mrb[0].mxu0
        %1005 = vmatprep.mubr.f32.mxu0 0.0
        %1006 = vmatmul.mubr.f32.gmra.mrb[0].mxu0 %v876
        %v1007 = vpop.f32.mrb[0].mxu0
        %v1008 = vadd.f32 %v845, %v1007
        %v1009 = vpop.f32.mrb[0].mxu0
        %1010 = vmatprep.mubr.f32.mxu0 0.0
        %1011 = vmatmul.mubr.f32.gmra.mrb[0].mxu0 %v879
        %v1012 = vpop.f32.mrb[0].mxu0
        %v1013 = vadd.f32 %v845, %v1012
        %v1014 = vpop.f32.mrb[0].mxu0
        %1015 = vmatprep.mubr.f32.mxu0 0.0
        %1016 = vmatmul.mubr.f32.gmra.mrb[0].mxu0 %v882
        %v1017 = vpop.f32.mrb[0].mxu0
        %v1018 = vadd.f32 %v845, %v1017
        %v1019 = vpop.f32.mrb[0].mxu0
        %1020 = vmatprep.mubr.f32.mxu0 0.0
        %1021 = vmatmul.mubr.f32.gmra.mrb[0].mxu0 %v885
        %v1022 = vpop.f32.mrb[0].mxu0
        %v1023 = vadd.f32 %v845, %v1022
        %v1024 = vpop.f32.mrb[0].mxu0
        %1025 = vmatprep.mubr.f32.mxu0 0.0
        %1026 = vmatmul.mubr.f32.gmra.mrb[0].mxu0 %v888
        %v1027 = vpop.f32.mrb[0].mxu0
        %v1028 = vadd.f32 %v845, %v1027
        %v1029 = vpop.f32.mrb[0].mxu0
        %1030 = vmatprep.mubr.f32.mxu0 0.0
        %1031 = vmatmul.mubr.f32.gmra.mrb[0].mxu0 %v891
        %v1032 = vpop.f32.mrb[0].mxu0
        %v1033 = vadd.f32 %v845, %v1032
        %v1034 = vpop.f32.mrb[0].mxu0
        %1035 = vmatprep.mubr.f32.mxu0 0.0
        %1036 = vmatmul.mubr.f32.gmra.mrb[0].mxu0 %v894
        %v1037 = vpop.f32.mrb[0].mxu0
        %v1038 = vadd.f32 %v845, %v1037
        %v1039 = vpop.f32.mrb[0].mxu0
        %1040 = vdwg.mxu0
        %v1041 = vlaneseq
        %v1042 = vand.u32 %v1041, 127
        %vm1043 = vcmp.lt.s32.totalorder %v1042, 16
        %v1044 = vld [vmem:[%s589] sm:$0xff]
        %v1045 = vld [vmem:[%s589 + $0x8] sm:$0xff]
        %v1046 = vld [vmem:[%s589 + $0x10] sm:$0xff]
        %v1047 = vld [vmem:[%s589 + $0x18] sm:$0xff]
        %v1048 = vld [vmem:[%s589 + $0x20] sm:$0xff]
        %v1049 = vld [vmem:[%s589 + $0x28] sm:$0xff]
        %v1050 = vld [vmem:[%s589 + $0x30] sm:$0xff]
        %v1051 = vld [vmem:[%s589 + $0x38] sm:$0xff]
        %v1052 = vld [vmem:[%s589 + $0x40] sm:$0xff]
        %v1053 = vld [vmem:[%s589 + $0x48] sm:$0xff]
        %v1054 = vld [vmem:[%s589 + $0x50] sm:$0xff]
        %v1055 = vld [vmem:[%s589 + $0x58] sm:$0xff]
        %v1056 = vld [vmem:[%s589 + $0x60] sm:$0xff]
        %v1057 = vld [vmem:[%s589 + $0x68] sm:$0xff]
        %v1058 = vld [vmem:[%s589 + $0x70] sm:$0xff]
        %v1059 = vld [vmem:[%s589 + $0x78] sm:$0xff]
        %1061 = vset.pattern.permute.xlu0 0
        %1062 = vperm.xlu0 %1061, %v1044
        %v1063 = vpop.permute.xlu0 %1062
        %1066 = vset.pattern.permute.xlu0 0
        %1067 = vperm.xlu0 %1066, %v1045
        %v1068 = vpop.permute.xlu0 %1067
        %1071 = vset.pattern.permute.xlu0 0
        %1072 = vperm.xlu0 %1071, %v1046
        %v1073 = vpop.permute.xlu0 %1072
        %1076 = vset.pattern.permute.xlu0 0
        %1077 = vperm.xlu0 %1076, %v1047
        %v1078 = vpop.permute.xlu0 %1077
        %1081 = vset.pattern.permute.xlu0 0
        %1082 = vperm.xlu0 %1081, %v1048
        %v1083 = vpop.permute.xlu0 %1082
        %1086 = vset.pattern.permute.xlu0 0
        %1087 = vperm.xlu0 %1086, %v1049
        %v1088 = vpop.permute.xlu0 %1087
        %1091 = vset.pattern.permute.xlu0 0
        %1092 = vperm.xlu0 %1091, %v1050
        %v1093 = vpop.permute.xlu0 %1092
        %1096 = vset.pattern.permute.xlu0 0
        %1097 = vperm.xlu0 %1096, %v1051
        %v1098 = vpop.permute.xlu0 %1097
        %1101 = vset.pattern.permute.xlu0 0
        %1102 = vperm.xlu0 %1101, %v1052
        %v1103 = vpop.permute.xlu0 %1102
        %1106 = vset.pattern.permute.xlu0 0
        %1107 = vperm.xlu0 %1106, %v1053
        %v1108 = vpop.permute.xlu0 %1107
        %1111 = vset.pattern.permute.xlu0 0
        %1112 = vperm.xlu0 %1111, %v1054
        %v1113 = vpop.permute.xlu0 %1112
        %1116 = vset.pattern.permute.xlu0 0
        %1117 = vperm.xlu0 %1116, %v1055
        %v1118 = vpop.permute.xlu0 %1117
        %1121 = vset.pattern.permute.xlu0 0
        %1122 = vperm.xlu0 %1121, %v1056
        %v1123 = vpop.permute.xlu0 %1122
        %1126 = vset.pattern.permute.xlu0 0
        %1127 = vperm.xlu0 %1126, %v1057
        %v1128 = vpop.permute.xlu0 %1127
        %1131 = vset.pattern.permute.xlu0 0
        %1132 = vperm.xlu0 %1131, %v1058
        %v1133 = vpop.permute.xlu0 %1132
        %1136 = vset.pattern.permute.xlu0 0
        %1137 = vperm.xlu0 %1136, %v1059
        %v1138 = vpop.permute.xlu0 %1137
        %v1140 = vsel %vm1043, %v1063, 1.0
        %v1141 = vsel %vm1043, %v1068, 1.0
        %v1142 = vsel %vm1043, %v1073, 1.0
        %v1143 = vsel %vm1043, %v1078, 1.0
        %v1144 = vsel %vm1043, %v1083, 1.0
        %v1145 = vsel %vm1043, %v1088, 1.0
        %v1146 = vsel %vm1043, %v1093, 1.0
        %v1147 = vsel %vm1043, %v1098, 1.0
        %v1148 = vsel %vm1043, %v1103, 1.0
        %v1149 = vsel %vm1043, %v1108, 1.0
        %v1150 = vsel %vm1043, %v1113, 1.0
        %v1151 = vsel %vm1043, %v1118, 1.0
        %v1152 = vsel %vm1043, %v1123, 1.0
        %v1153 = vsel %vm1043, %v1128, 1.0
        %v1154 = vsel %vm1043, %v1133, 1.0
        %v1155 = vsel %vm1043, %v1138, 1.0
        %v1156 = vmul.f32 %v963, %v1140
        %v1157 = vmul.f32 %v968, %v1141
        %v1158 = vmul.f32 %v973, %v1142
        %v1159 = vmul.f32 %v978, %v1143
        %v1160 = vmul.f32 %v983, %v1144
        %v1161 = vmul.f32 %v988, %v1145
        %v1162 = vmul.f32 %v993, %v1146
        %v1163 = vmul.f32 %v998, %v1147
        %v1164 = vmul.f32 %v1003, %v1148
        %v1165 = vmul.f32 %v1008, %v1149
        %v1166 = vmul.f32 %v1013, %v1150
        %v1167 = vmul.f32 %v1018, %v1151
        %v1168 = vmul.f32 %v1023, %v1152
        %v1169 = vmul.f32 %v1028, %v1153
        %v1170 = vmul.f32 %v1033, %v1154
        %v1171 = vmul.f32 %v1038, %v1155
        %v1172 = vlaneseq
        %v1173 = vshrl.u32 %v1172, 7
        %v1174 = vadd.s32 %v1173, 8
        %v1175 = vadd.s32 %v1173, 16
        %v1176 = vadd.s32 %v1173, 24
        %s1177 = smul.u32 %s36, 32
        %v1178 = vstv %s1177
        %v1179 = vadd.s32 %v1173, %v1178
        %v1180 = vadd.s32 %v1174, %v1178
        %v1181 = vadd.s32 %v1175, %v1178
        %v1182 = vadd.s32 %v1176, %v1178
        %v1183 = vld [vmem:[%s593] sm:$0x1]
        %v1184 = vlaneseq
        %v1185 = vshrl.u32 %v1184, 7
        %v1186 = vsub.s32 0, %v1185
        %v1187 = vrot.slane %v1183, %v1186
        %vm1188 = vcmp.eq.s32.totalorder %v1187, %v1179
        %vm1189 = vcmp.eq.s32.totalorder %v1187, %v1180
        %vm1190 = vcmp.eq.s32.totalorder %v1187, %v1181
        %vm1191 = vcmp.eq.s32.totalorder %v1187, %v1182
        %v1192 = vsel %vm1188, 1, 0
        %v1193 = vsel %vm1189, 1, 0
        %v1194 = vsel %vm1190, 1, 0
        %v1195 = vsel %vm1191, 1, 0
        %v1196 = vcvt.s32.f32 %v1192
        %v1197 = vcvt.s32.f32 %v1193
        %v1198 = vcvt.s32.f32 %v1194
        %v1199 = vcvt.s32.f32 %v1195
        %v1200 = vld [vmem:[#allocation2] sm:$0xff]
        %v1201 = vld [vmem:[#allocation2 + $0x8] sm:$0xff]
        %v1202 = vld [vmem:[#allocation2 + $0x10] sm:$0xff]
        %v1203 = vld [vmem:[#allocation2 + $0x18] sm:$0xff]
        %1204 = vmatprep.subr.mxu0 0.0
        %1205 = vmatpush1.msra.mxu0 %v1156
        %1206 = vmatprep.subr.mxu0 0.0
        %1207 = vmatpush1.msra.mxu0 %v1157
        %1208 = vmatprep.subr.mxu0 0.0
        %1209 = vmatpush1.msra.mxu0 %v1158
        %1210 = vmatprep.subr.mxu0 0.0
        %1211 = vmatpush1.msra.mxu0 %v1159
        %1212 = vmatprep.subr.mxu0 0.0
        %1213 = vmatpush1.msra.mxu0 %v1160
        %1214 = vmatprep.subr.mxu0 0.0
        %1215 = vmatpush1.msra.mxu0 %v1161
        %1216 = vmatprep.subr.mxu0 0.0
        %1217 = vmatpush1.msra.mxu0 %v1162
        %1218 = vmatprep.subr.mxu0 0.0
        %1219 = vmatpush1.msra.mxu0 %v1163
        %1220 = vmatprep.subr.mxu0 0.0
        %1221 = vmatpush1.msra.mxu0 %v1164
        %1222 = vmatprep.subr.mxu0 0.0
        %1223 = vmatpush1.msra.mxu0 %v1165
        %1224 = vmatprep.subr.mxu0 0.0
        %1225 = vmatpush1.msra.mxu0 %v1166
        %1226 = vmatprep.subr.mxu0 0.0
        %1227 = vmatpush1.msra.mxu0 %v1167
        %1228 = vmatprep.subr.mxu0 0.0
        %1229 = vmatpush1.msra.mxu0 %v1168
        %1230 = vmatprep.subr.mxu0 0.0
        %1231 = vmatpush1.msra.mxu0 %v1169
        %1232 = vmatprep.subr.mxu0 0.0
        %1233 = vmatpush1.msra.mxu0 %v1170
        %1234 = vmatprep.subr.mxu0 0.0
        %1235 = vmatpush1.msra.mxu0 %v1171
        %1236 = vmatprep.subr.mxu0 0.0
        %1237 = vmatpush1.msra.mxu0 0.0
        %1238 = vmatprep.subr.mxu0 0.0
        %1239 = vmatpush1.msra.mxu0 0.0
        %1240 = vmatprep.subr.mxu0 0.0
        %1241 = vmatpush1.msra.mxu0 0.0
        %1242 = vmatprep.subr.mxu0 0.0
        %1243 = vmatpush1.msra.mxu0 0.0
        %1244 = vmatprep.subr.mxu0 0.0
        %1245 = vmatpush1.msra.mxu0 0.0
        %1246 = vmatprep.subr.mxu0 0.0
        %1247 = vmatpush1.msra.mxu0 0.0
        %1248 = vmatprep.subr.mxu0 0.0
        %1249 = vmatpush1.msra.mxu0 0.0
        %1250 = vmatprep.subr.mxu0 0.0
        %1251 = vmatpush1.msra.mxu0 0.0
        %1252 = vmatprep.subr.mxu0 0.0
        %1253 = vmatpush1.msra.mxu0 0.0
        %1254 = vmatprep.subr.mxu0 0.0
        %1255 = vmatpush1.msra.mxu0 0.0
        %1256 = vmatprep.subr.mxu0 0.0
        %1257 = vmatpush1.msra.mxu0 0.0
        %1258 = vmatprep.subr.mxu0 0.0
        %1259 = vmatpush1.msra.mxu0 0.0
        %1260 = vmatprep.subr.mxu0 0.0
        %1261 = vmatpush1.msra.mxu0 0.0
        %1262 = vmatprep.subr.mxu0 0.0
        %1263 = vmatpush1.msra.mxu0 0.0
        %1264 = vmatprep.subr.mxu0 0.0
        %1265 = vmatpush1.msra.mxu0 0.0
        %1266 = vmatprep.subr.mxu0 0.0
        %1267 = vmatpush1.msra.mxu0 0.0
        %1268 = vmatprep.mubr.f32.mxu0 0.0
        %1269 = vmatmul.mubr.f32.gmra.mrb[0].mxu0 %v1196
        %v1270 = vpop.f32.mrb[0].mxu0
        %v1271 = vadd.f32 0.0, %v1270
        %v1272 = vpop.f32.mrb[0].mxu0
        %1273 = vmatprep.mubr.f32.mxu0 0.0
        %1274 = vmatmul.mubr.f32.gmra.mrb[0].mxu0 %v1197
        %v1275 = vpop.f32.mrb[0].mxu0
        %v1276 = vadd.f32 0.0, %v1275
        %v1277 = vpop.f32.mrb[0].mxu0
        %1278 = vmatprep.mubr.f32.mxu0 0.0
        %1279 = vmatmul.mubr.f32.gmra.mrb[0].mxu0 %v1198
        %v1280 = vpop.f32.mrb[0].mxu0
        %v1281 = vadd.f32 0.0, %v1280
        %v1282 = vpop.f32.mrb[0].mxu0
        %1283 = vmatprep.mubr.f32.mxu0 0.0
        %1284 = vmatmul.mubr.f32.gmra.mrb[0].mxu0 %v1199
        %v1285 = vpop.f32.mrb[0].mxu0
        %v1286 = vadd.f32 0.0, %v1285
        %v1287 = vpop.f32.mrb[0].mxu0
        %1288 = vdwg.mxu0
        %v1289 = vadd.f32 %v1200, %v1271
        %v1290 = vadd.f32 %v1201, %v1276
        %v1291 = vadd.f32 %v1202, %v1281
        %v1292 = vadd.f32 %v1203, %v1286
        %vm1293 = vcmask 138240
        %1294 = vst.msk [vmem:[#allocation2] sm:$0xff] %vm1293, %v1289
        %1295 = vst.msk [vmem:[#allocation2 + $0x8] sm:$0xff] %vm1293, %v1290
        %1296 = vst.msk [vmem:[#allocation2 + $0x10] sm:$0xff] %vm1293, %v1291
        %1297 = vst.msk [vmem:[#allocation2 + $0x18] sm:$0xff] %vm1293, %v1292
        %p1298 = scmp.eq.s32.totalorder %s37, 2
        // Predicated region
        $region89: #{tpu_custom_call.1} parent=83 // pred_check
          %p1299 = pneg %p1298
        $region90: #{tpu_custom_call.1} parent=83 // pred_check_branch
          %1301 = sbr.rel (%p1299) target = $region92
        $region91: #{tpu_custom_call.1} parent=83 // pred_region
          %v1302 = vld [vmem:[#allocation2] sm:$0xff]
          %v1303 = vld [vmem:[#allocation2 + $0x8] sm:$0xff]
          %v1304 = vld [vmem:[#allocation2 + $0x10] sm:$0xff]
          %v1305 = vld [vmem:[#allocation2 + $0x18] sm:$0xff]
          %v1306 = vmax.f32 %v1302, 1.0
          %v1307 = vmax.f32 %v1303, 1.0
          %v1308 = vmax.f32 %v1304, 1.0
          %v1309 = vmax.f32 %v1305, 1.0
          %v1310 = vrcp.pop %v1306
          %v1311 = vrcp.pop %v1307
          %v1312 = vrcp.pop %v1308
          %v1313 = vrcp.pop %v1309
          %1315 = vset.pattern.permute.xlu0 16
          %1316 = vperm.xlu0 %1315, %v1310
          %v1317 = vpop.permute.xlu0 %1316
          %1320 = vset.pattern.permute.xlu0 16
          %1321 = vperm.xlu0 %1320, %v1311
          %v1322 = vpop.permute.xlu0 %1321
          %1325 = vset.pattern.permute.xlu0 16
          %1326 = vperm.xlu0 %1325, %v1312
          %v1327 = vpop.permute.xlu0 %1326
          %1330 = vset.pattern.permute.xlu0 16
          %1331 = vperm.xlu0 %1330, %v1313
          %v1332 = vpop.permute.xlu0 %1331
          %v1334 = vmul.f32 %v1302, %v1317
          %v1335 = vmul.f32 %v1303, %v1322
          %v1336 = vmul.f32 %v1304, %v1327
          %v1337 = vmul.f32 %v1305, %v1332
          %v1338 = vld [vmem:[%s577] sm:$0xff]
          %v1339 = vld [vmem:[%s577 + $0x8] sm:$0xff]
          %v1340 = vld [vmem:[%s577 + $0x10] sm:$0xff]
          %v1341 = vld [vmem:[%s577 + $0x18] sm:$0xff]
          %v1342 = vld [vmem:[%s8] sm:$0x1]
          %1344 = vset.pattern.permute.xlu0 0
          %1345 = vperm.xlu0 %1344, %v1338
          %v1346 = vpop.permute.xlu0 %1345
          %1349 = vset.pattern.permute.xlu0 0
          %1350 = vperm.xlu0 %1349, %v1339
          %v1351 = vpop.permute.xlu0 %1350
          %1354 = vset.pattern.permute.xlu0 0
          %1355 = vperm.xlu0 %1354, %v1340
          %v1356 = vpop.permute.xlu0 %1355
          %1359 = vset.pattern.permute.xlu0 0
          %1360 = vperm.xlu0 %1359, %v1341
          %v1361 = vpop.permute.xlu0 %1360
          %v1364 = vlaneseq
          %v1365 = vshrl.u32 %v1364, 7
          %v1366 = vsub.s32 0, %v1365
          %v1367 = vrot.slane %v1342, %v1366
          %v1369 = vmul.f32 %v1346, %v1367
          %v1370 = vmul.f32 %v1351, %v1367
          %v1371 = vmul.f32 %v1356, %v1367
          %v1372 = vmul.f32 %v1361, %v1367
          %v1373 = vadd.f32 %v1334, %v1369
          %v1374 = vadd.f32 %v1335, %v1370
          %v1375 = vadd.f32 %v1336, %v1371
          %v1376 = vadd.f32 %v1337, %v1372
          %v1377 = vld [vmem:[%s9] sm:$0x1]
          %v1379 = vlaneseq
          %v1380 = vshrl.u32 %v1379, 7
          %v1381 = vsub.s32 0, %v1380
          %v1382 = vrot.slane %v1377, %v1381
          %v1384 = vadd.f32 %v1373, %v1382
          %v1385 = vadd.f32 %v1374, %v1382
          %v1386 = vadd.f32 %v1375, %v1382
          %v1387 = vadd.f32 %v1376, %v1382
          %v1388 = vld [vmem:[%s10] sm:$0x1]
          %v1390 = vlaneseq
          %v1391 = vshrl.u32 %v1390, 7
          %v1392 = vsub.s32 0, %v1391
          %v1393 = vrot.slane %v1388, %v1392
          %v1395 = vmul.f32 %v1384, %v1393
          %v1396 = vmul.f32 %v1385, %v1393
          %v1397 = vmul.f32 %v1386, %v1393
          %v1398 = vmul.f32 %v1387, %v1393
          %v1399 = vld [vmem:[%s11] sm:$0x1]
          %v1401 = vlaneseq
          %v1402 = vshrl.u32 %v1401, 7
          %v1403 = vsub.s32 0, %v1402
          %v1404 = vrot.slane %v1399, %v1403
          %v1406 = vadd.f32 %v1395, %v1404
          %v1407 = vadd.f32 %v1396, %v1404
          %v1408 = vadd.f32 %v1397, %v1404
          %v1409 = vadd.f32 %v1398, %v1404
          %v1410 = vmax.f32 %v1406, 0.0
          %v1411 = vmax.f32 %v1407, 0.0
          %v1412 = vmax.f32 %v1408, 0.0
          %v1413 = vmax.f32 %v1409, 0.0
          %v1414 = vld [vmem:[%s12] sm:$0xff]
          %v1415 = vld [vmem:[%s12 + $0x8] sm:$0xff]
          %v1416 = vld [vmem:[%s13] sm:$0x1]
          %v1418 = vlaneseq
          %v1419 = vshrl.u32 %v1418, 7
          %v1420 = vsub.s32 0, %v1419
          %v1421 = vrot.slane %v1416, %v1420
          %v1424 = vsel %vm847, %v1410, 0
          %v1427 = vsel %vm847, %v1411, 0
          %v1430 = vsel %vm847, %v1412, 0
          %v1433 = vsel %vm847, %v1413, 0
          %1435 = vmatprep.subr.mxu0 0.0
          %1436 = vmatpush1.msra.mxu0 %v1414
          %1437 = vmatprep.subr.mxu0 0.0
          %1438 = vmatpush1.msra.mxu0 %v1415
          %1439 = vmatprep.subr.mxu0 0.0
          %1440 = vmatpush1.msra.mxu0 0.0
          %1441 = vmatprep.subr.mxu0 0.0
          %1442 = vmatpush1.msra.mxu0 0.0
          %1443 = vmatprep.subr.mxu0 0.0
          %1444 = vmatpush1.msra.mxu0 0.0
          %1445 = vmatprep.subr.mxu0 0.0
          %1446 = vmatpush1.msra.mxu0 0.0
          %1447 = vmatprep.subr.mxu0 0.0
          %1448 = vmatpush1.msra.mxu0 0.0
          %1449 = vmatprep.subr.mxu0 0.0
          %1450 = vmatpush1.msra.mxu0 0.0
          %1451 = vmatprep.subr.mxu0 0.0
          %1452 = vmatpush1.msra.mxu0 0.0
          %1453 = vmatprep.subr.mxu0 0.0
          %1454 = vmatpush1.msra.mxu0 0.0
          %1455 = vmatprep.subr.mxu0 0.0
          %1456 = vmatpush1.msra.mxu0 0.0
          %1457 = vmatprep.subr.mxu0 0.0
          %1458 = vmatpush1.msra.mxu0 0.0
          %1459 = vmatprep.subr.mxu0 0.0
          %1460 = vmatpush1.msra.mxu0 0.0
          %1461 = vmatprep.subr.mxu0 0.0
          %1462 = vmatpush1.msra.mxu0 0.0
          %1463 = vmatprep.subr.mxu0 0.0
          %1464 = vmatpush1.msra.mxu0 0.0
          %1465 = vmatprep.subr.mxu0 0.0
          %1466 = vmatpush1.msra.mxu0 0.0
          %1467 = vmatprep.subr.mxu0 0.0
          %1468 = vmatpush1.msra.mxu0 0.0
          %1469 = vmatprep.subr.mxu0 0.0
          %1470 = vmatpush1.msra.mxu0 0.0
          %1471 = vmatprep.subr.mxu0 0.0
          %1472 = vmatpush1.msra.mxu0 0.0
          %1473 = vmatprep.subr.mxu0 0.0
          %1474 = vmatpush1.msra.mxu0 0.0
          %1475 = vmatprep.subr.mxu0 0.0
          %1476 = vmatpush1.msra.mxu0 0.0
          %1477 = vmatprep.subr.mxu0 0.0
          %1478 = vmatpush1.msra.mxu0 0.0
          %1479 = vmatprep.subr.mxu0 0.0
          %1480 = vmatpush1.msra.mxu0 0.0
          %1481 = vmatprep.subr.mxu0 0.0
          %1482 = vmatpush1.msra.mxu0 0.0
          %1483 = vmatprep.subr.mxu0 0.0
          %1484 = vmatpush1.msra.mxu0 0.0
          %1485 = vmatprep.subr.mxu0 0.0
          %1486 = vmatpush1.msra.mxu0 0.0
          %1487 = vmatprep.subr.mxu0 0.0
          %1488 = vmatpush1.msra.mxu0 0.0
          %1489 = vmatprep.subr.mxu0 0.0
          %1490 = vmatpush1.msra.mxu0 0.0
          %1491 = vmatprep.subr.mxu0 0.0
          %1492 = vmatpush1.msra.mxu0 0.0
          %1493 = vmatprep.subr.mxu0 0.0
          %1494 = vmatpush1.msra.mxu0 0.0
          %1495 = vmatprep.subr.mxu0 0.0
          %1496 = vmatpush1.msra.mxu0 0.0
          %1497 = vmatprep.subr.mxu0 0.0
          %1498 = vmatpush1.msra.mxu0 0.0
          %1499 = vmatprep.mubr.f32.mxu0 0.0
          %1500 = vmatmul.mubr.f32.gmra.mrb[0].mxu0 %v1424
          %v1501 = vpop.f32.mrb[0].mxu0
          %v1502 = vadd.f32 %v1421, %v1501
          %v1503 = vpop.f32.mrb[0].mxu0
          %1504 = vmatprep.mubr.f32.mxu0 0.0
          %1505 = vmatmul.mubr.f32.gmra.mrb[0].mxu0 %v1427
          %v1506 = vpop.f32.mrb[0].mxu0
          %v1507 = vadd.f32 %v1421, %v1506
          %v1508 = vpop.f32.mrb[0].mxu0
          %1509 = vmatprep.mubr.f32.mxu0 0.0
          %1510 = vmatmul.mubr.f32.gmra.mrb[0].mxu0 %v1430
          %v1511 = vpop.f32.mrb[0].mxu0
          %v1512 = vadd.f32 %v1421, %v1511
          %v1513 = vpop.f32.mrb[0].mxu0
          %1514 = vmatprep.mubr.f32.mxu0 0.0
          %1515 = vmatmul.mubr.f32.gmra.mrb[0].mxu0 %v1433
          %v1516 = vpop.f32.mrb[0].mxu0
          %v1517 = vadd.f32 %v1421, %v1516
          %v1518 = vpop.f32.mrb[0].mxu0
          %1519 = vdwg.mxu0
          %v1520 = vxor.u32 %v1502, 2147483648
          %v1521 = vxor.u32 %v1507, 2147483648
          %v1522 = vxor.u32 %v1512, 2147483648
          %v1523 = vxor.u32 %v1517, 2147483648
          %v1524 = vmul.f32 %v1520, 1.442695
          %v1525 = vpow.pop %v1524
          %v1526 = vmul.f32 %v1521, 1.442695
          %v1527 = vpow.pop %v1526
          %v1528 = vmul.f32 %v1522, 1.442695
          %v1529 = vpow.pop %v1528
          %v1530 = vmul.f32 %v1523, 1.442695
          %v1531 = vpow.pop %v1530
          %v1532 = vadd.f32 %v1525, 1.0
          %v1533 = vadd.f32 %v1527, 1.0
          %v1534 = vadd.f32 %v1529, 1.0
          %v1535 = vadd.f32 %v1531, 1.0
          %v1536 = vrcp.pop %v1532
          %v1537 = vmul.f32 1.0, %v1536
          %v1538 = vrcp.pop %v1533
          %v1539 = vmul.f32 1.0, %v1538
          %v1540 = vrcp.pop %v1534
          %v1541 = vmul.f32 1.0, %v1540
          %v1542 = vrcp.pop %v1535
          %v1543 = vmul.f32 1.0, %v1542
          %v1544 = vld [vmem:[%s14] sm:$0x1]
          %v1546 = vlaneseq
          %v1547 = vshrl.u32 %v1546, 7
          %v1548 = vsub.s32 0, %v1547
          %v1549 = vrot.slane %v1544, %v1548
          %v1551 = vmul.f32 %v1537, %v1549
          %v1552 = vmul.f32 %v1539, %v1549
          %v1553 = vmul.f32 %v1541, %v1549
          %v1554 = vmul.f32 %v1543, %v1549
          %v1555 = vsel %vm628, %v1551, 0.0
          %1556 = vadd.xlane.f32.xlu0 %v1555
          %v1557 = vpop.xlane.xlu0 %1556
          %v1558 = vsel %vm628, %v1552, 0.0
          %1559 = vadd.xlane.f32.xlu0 %v1558
          %v1560 = vpop.xlane.xlu0 %1559
          %v1561 = vsel %vm628, %v1553, 0.0
          %1562 = vadd.xlane.f32.xlu0 %v1561
          %v1563 = vpop.xlane.xlu0 %1562
          %v1564 = vsel %vm628, %v1554, 0.0
          %1565 = vadd.xlane.f32.xlu0 %v1564
          %v1566 = vpop.xlane.xlu0 %1565
          %v1567 = vld [vmem:[#allocation3] sm:$0x1]
          %v1569 = vlaneseq
          %v1570 = vshrl.u32 %v1569, 7
          %v1571 = vsub.s32 0, %v1570
          %v1572 = vrot.slane %v1567, %v1571
          %v1574 = vadd.f32 %v1557, %v1572
          %v1575 = vadd.f32 %v1560, %v1572
          %v1576 = vadd.f32 %v1563, %v1572
          %v1577 = vadd.f32 %v1566, %v1572
          %1579 = vset.pattern.permute.xlu0 0
          %1580 = vperm.xlu0 %1579, %v1574
          %v1581 = vpop.permute.xlu0 %1580
          %1584 = vset.pattern.permute.xlu0 0
          %1585 = vperm.xlu0 %1584, %v1575
          %v1586 = vpop.permute.xlu0 %1585
          %1589 = vset.pattern.permute.xlu0 0
          %1590 = vperm.xlu0 %1589, %v1576
          %v1591 = vpop.permute.xlu0 %1590
          %1594 = vset.pattern.permute.xlu0 0
          %1595 = vperm.xlu0 %1594, %v1577
          %v1596 = vpop.permute.xlu0 %1595
          %1598 = vst [vmem:[%s572] sm:$0xff] %v1581
          %1599 = vst [vmem:[%s572 + $0x8] sm:$0xff] %v1586
          %1600 = vst [vmem:[%s572 + $0x10] sm:$0xff] %v1591
          %1601 = vst [vmem:[%s572 + $0x18] sm:$0xff] %v1596
        $region92: #{tpu_custom_call.1} parent=83 // pred_fallthru
          _
        %s1602 = sand.u32 %s408, 1
        %s1603 = scalar_lea.sflag [#allocation5], %s1602
        %s1604 = sand.u32 %s408, 1
        %s1605 = smul.addr %s1604, 32
        %s1606 = scalar_lea.vmem [#allocation4], %s1605
        // Predicated region
        $region93: #{tpu_custom_call.1} parent=83 // pred_check
          %p1607 = pneg %p418
        $region94: #{tpu_custom_call.1} parent=83 // pred_check_branch
          %1609 = sbr.rel (%p1607) target = $region96
        $region95: #{tpu_custom_call.1} parent=83 // pred_region
          %s1610 = smul.u32 4, %s36
          %s1612 = ssub.s32 512, 512
          %1613 = vsyncadd %s1603, %s1612
          %s1614 = smul.addr %s1610, 128
          %s1615 = scalar_lea.hbm %s16, %s1614
          %s1616 = sshll.u32 %s1606, 4
          %s1617 = int_to_ptr.vmem [resolvable:$true] %s1616
          %1622 = dma.vmem_to_hbm [thread:$0]  %s1617, 512, %s1615, %s1603, 128, 128, 8
        $region96: #{tpu_custom_call.1} parent=83 // pred_fallthru
          _
      $region84: #{tpu_custom_call.1} parent=5 // pred_fallthru
        _
      %p1623 = scmp.le.s32.totalorder 2, %s27
      // Predicated region
      $region97: #{tpu_custom_call.1} parent=5 // pred_check
        %p1624 = pneg %p1623
      $region98: #{tpu_custom_call.1} parent=5 // pred_check_branch
        %1626 = sbr.rel (%p1624) target = $region100
      $region99: #{tpu_custom_call.1} parent=5 // pred_region
        %s1627 = ssub.s32 %s27, 2
        // Predicated region
        $region101: #{tpu_custom_call.1} parent=99 // pred_check
          %p1628 = pneg %p424
        $region102: #{tpu_custom_call.1} parent=99 // pred_check_branch
          %1630 = sbr.rel (%p1628) target = $region104
        $region103: #{tpu_custom_call.1} parent=99 // pred_region
          %s1631 = sand.u32 %s409, 1
          %s1632 = scalar_lea.sflag [#allocation5], %s1631
          %s1633 = sand.u32 %s409, 1
          %s1634 = smul.addr %s1633, 32
          %s1635 = scalar_lea.vmem [#allocation4], %s1634
          %1636 = dma.done %s1632, 512
        $region104: #{tpu_custom_call.1} parent=99 // pred_fallthru
          _
      $region100: #{tpu_custom_call.1} parent=5 // pred_fallthru
        _
    $region6: #{tpu_custom_call.1} parent=1 // loop_footer
      %s31 = sadd.s32 1, %s27
    $region7: #{tpu_custom_call.1} parent=1 // loop_footer_branch
      %26 = sbr.rel target = $region3
    $region8: #{tpu_custom_call.1} parent=1 // loop_exit
      _
    %1637 = vsyncpa [#allocation5], 1
    %s1638 = scalar_lea.sflag [#allocation5], 1
    %1639 = vsyncpa %s1638, 1

</llo_original>
